<compile_context>
chip_gen: v7x
topology: tpu7x:2x2x1
jax: 0.10.0
libtpu: 0.0.40
codegen_flags: <defaults>
</compile_context>

<pallas_src>
import functools

import jax
import jax.numpy as jnp
from jax.experimental import pallas as pl
from jax.experimental.pallas import tpu as pltpu


# ---------------------------------------------------------------------------
# padding helpers (wrapper-side layout plumbing)
# ---------------------------------------------------------------------------
def _round_up(x, m):
    return -(-x // m) * m


def _pad_axis(x, axis, target):
    pad = target - x.shape[axis]
    if pad <= 0:
        return x
    widths = [(0, 0)] * x.ndim
    widths[axis] = (0, pad)
    return jnp.pad(x, widths)


def _pad_gate(w, rows_target, r, r_pad):
    """Pad a (rows, 4*r) gate weight/bias to (rows_target, 4*r_pad), per-gate."""
    rows = w.shape[0]
    w = w.reshape(rows, 4, r)
    w = _pad_axis(w, 2, r_pad)
    w = w.reshape(rows, 4 * r_pad)
    return _pad_axis(w, 0, rows_target)


# ---------------------------------------------------------------------------
# Kernel 1: att_embed = ReLU(Linear(att_feats)), row-tiled
# ---------------------------------------------------------------------------
def _att_embed_kernel(x_ref, w_ref, b_ref, o_ref):
    y = jnp.dot(x_ref[...], w_ref[...], preferred_element_type=jnp.float32) + b_ref[...]
    o_ref[...] = jnp.maximum(y, 0.0)


def att_embed(x_flat, w, b):
    n, f = x_flat.shape
    e = w.shape[1]
    tm = 512 if n >= 512 else _round_up(n, 8)
    n_pad = _round_up(n, tm)
    if n_pad != n:
        x_flat = jnp.pad(x_flat, ((0, n_pad - n), (0, 0)))
    out = pl.pallas_call(
        _att_embed_kernel,
        out_shape=jax.ShapeDtypeStruct((n_pad, e), jnp.float32),
        grid=(n_pad // tm,),
        in_specs=[
            pl.BlockSpec((tm, f), lambda i: (i, 0)),
            pl.BlockSpec((f, e), lambda i: (0, 0)),
            pl.BlockSpec((1, e), lambda i: (0, 0)),
        ],
        out_specs=pl.BlockSpec((tm, e), lambda i: (i, 0)),
        compiler_params=pltpu.CompilerParams(
            dimension_semantics=("parallel",)),
    )(x_flat, w, b)
    return out[:n]


# ---------------------------------------------------------------------------
# Kernel 2: fused attention-LSTM time loop + log_softmax
#   grid = (batch_blocks, T+1); h/c are VMEM scratch carried across t.
# ---------------------------------------------------------------------------
def _fused_core_kernel(xt_ref, attf_ref, att3_ref,
                       wa_ref, wh_ref, wv_ref,
                       wbig_ref, bl_ref, wo_ref, bo_ref,
                       lp_ref, h_ref, c_ref):
    t = pl.program_id(1)

    @pl.when(t == 0)
    def _():
        h_ref[...] = jnp.zeros_like(h_ref)
        c_ref[...] = jnp.zeros_like(c_ref)

    xt = xt_ref[0]                     # (BB, E)
    h = h_ref[...]                     # (BB, R)
    c = c_ref[...]                     # (BB, R)
    att3 = att3_ref[...]               # (BB, A, E)

    BB, A, _ = att3_ref.shape
    H = wa_ref.shape[1]
    R = h_ref.shape[1]

    # --- soft attention over the A attention slots ---
    pre = jnp.dot(attf_ref[...], wa_ref[...],
                  preferred_element_type=jnp.float32).reshape(BB, A, H)
    hw = jnp.dot(h, wh_ref[...], preferred_element_type=jnp.float32)   # (BB, H)
    e_act = jnp.tanh(pre + hw[:, None, :])                             # (BB, A, H)
    score = jnp.sum(e_act * wv_ref[...][None, :, :], axis=-1)          # (BB, A)
    score = score - jnp.max(score, axis=1, keepdims=True)
    p = jnp.exp(score)
    inv = pl.reciprocal(jnp.sum(p, axis=1, keepdims=True), approx=True)
    alpha = p * inv                                                    # (BB, A)
    ctx = jnp.sum(alpha[:, :, None] * att3, axis=1)                    # (BB, E)

    # --- fused LSTM gate matmul: [xt | ctx | h] @ [wx; wc; whh] ---
    zcat = jnp.concatenate([xt, ctx, h], axis=1)                       # (BB, 2E+R)
    gates = jnp.dot(zcat, wbig_ref[...],
                    preferred_element_type=jnp.float32) + bl_ref[...]  # (BB, 4R)
    i_g = jax.nn.sigmoid(gates[:, 0 * R:1 * R])
    f_g = jax.nn.sigmoid(gates[:, 1 * R:2 * R])
    o_g = jax.nn.sigmoid(gates[:, 2 * R:3 * R])
    g_g = jnp.tanh(gates[:, 3 * R:4 * R])
    c_new = f_g * c + i_g * g_g
    h_new = o_g * jnp.tanh(c_new)
    h_ref[...] = h_new
    c_ref[...] = c_new

    # --- output projection + log_softmax (padded vocab lanes carry -1e30 bias) ---
    logits = (jnp.dot(h_new, wo_ref[...], preferred_element_type=jnp.float32)
              + bo_ref[...])                                           # (BB, V_pad)
    m = jnp.max(logits, axis=1, keepdims=True)
    lse = m + jnp.log(jnp.sum(jnp.exp(logits - m), axis=1, keepdims=True))
    lp_ref[0] = logits - lse


def fused_core(xt_all, att_flat, att_3d, wa, wh, wv, wbig, bl, wo, bo):
    T1, B, E = xt_all.shape
    A = att_3d.shape[1]
    H = wa.shape[1]
    R4 = wbig.shape[1]
    R = R4 // 4
    V = wo.shape[1]

    BB = 8 if B % 8 == 0 else B        # batch block (sublane-aligned when possible)
    nb = B // BB

    flops_step = 2 * (BB * A * E * H + BB * R * H + BB * (2 * E + R) * 4 * R + BB * R * V)
    cost = pl.CostEstimate(
        flops=int(flops_step * nb * T1),
        transcendentals=int((BB * (A * H + A + 5 * R + V)) * nb * T1),
        bytes_accessed=int(4 * (wa.size + wh.size + wv.size + wbig.size + bl.size
                                + wo.size + bo.size + xt_all.size
                                + att_flat.size + att_3d.size + T1 * B * V)),
    )

    return pl.pallas_call(
        _fused_core_kernel,
        out_shape=jax.ShapeDtypeStruct((T1, B, V), jnp.float32),
        grid=(nb, T1),
        in_specs=[
            pl.BlockSpec((1, BB, E), lambda b, t: (t, b, 0)),     # xt per step
            pl.BlockSpec((BB * A, E), lambda b, t: (b, 0)),       # att flat view
            pl.BlockSpec((BB, A, E), lambda b, t: (b, 0, 0)),     # att 3d view
            pl.BlockSpec((E, H), lambda b, t: (0, 0)),            # wa (resident)
            pl.BlockSpec((R, H), lambda b, t: (0, 0)),            # wh (resident)
            pl.BlockSpec((1, H), lambda b, t: (0, 0)),            # wv (resident)
            pl.BlockSpec((2 * E + R, 4 * R), lambda b, t: (0, 0)),  # [wx;wc;whh]
            pl.BlockSpec((1, 4 * R), lambda b, t: (0, 0)),        # gate bias
            pl.BlockSpec((R, V), lambda b, t: (0, 0)),            # wo (resident)
            pl.BlockSpec((1, V), lambda b, t: (0, 0)),            # bo (resident)
        ],
        out_specs=pl.BlockSpec((1, BB, V), lambda b, t: (t, b, 0)),
        scratch_shapes=[pltpu.VMEM((BB, R), jnp.float32),         # h (carried)
                        pltpu.VMEM((BB, R), jnp.float32)],        # c (carried)
        compiler_params=pltpu.CompilerParams(
            dimension_semantics=("parallel", "arbitrary"),
            vmem_limit_bytes=96 * 1024 * 1024),
        cost_estimate=cost,
    )(xt_all, att_flat, att_3d, wa, wh, wv, wbig, bl, wo, bo)


# ---------------------------------------------------------------------------
# Parameters (deterministic init, natural / unpadded sizes)
# ---------------------------------------------------------------------------
def init_params(key, vocab_size, E, R, F, H_att):
    ks = jax.random.split(key, 9)
    s = 0.1
    params = {
        "embed": jax.random.normal(ks[0], (vocab_size + 1, E)) * s,
        "att_w": jax.random.normal(ks[1], (F, E)) * s,
        "att_b": jnp.zeros((1, E)),
        "wa": jax.random.normal(ks[2], (E, H_att)) * s,
        "wh": jax.random.normal(ks[3], (R, H_att)) * s,
        "wv": jax.random.normal(ks[4], (1, H_att)) * s,
        "wx": jax.random.normal(ks[5], (E, 4 * R)) * s,
        "wc": jax.random.normal(ks[6], (E, 4 * R)) * s,
        "whh": jax.random.normal(ks[7], (R, 4 * R)) * s,
        "bl": jnp.zeros((1, 4 * R)),
        "wo": jax.random.normal(ks[8], (R, vocab_size + 1)) * s,
        "bo": jnp.zeros((1, vocab_size + 1)),
    }
    return jax.tree.map(lambda x: jnp.asarray(x, jnp.float32), params)


# ---------------------------------------------------------------------------
# Forward pass (mirrors MoreAttenModel.forward with sample_rate = 0)
# ---------------------------------------------------------------------------
def more_atten_forward(att_feats, labels, params, seq_length):
    B, A, F = att_feats.shape
    E = params["att_w"].shape[1]
    R = params["whh"].shape[0]
    H = params["wa"].shape[1]
    V = params["wo"].shape[1]                 # vocab_size + 1

    E_pad = _round_up(E, 128)
    R_pad = _round_up(R, 128)
    H_pad = _round_up(H, 128)
    V_pad = _round_up(V, 128)

    # --- pad weights to lane-dense, MXU-aligned shapes (zeros don't change the math) ---
    att_w = _pad_axis(params["att_w"], 1, E_pad)                    # (F, E_pad)
    att_b = _pad_axis(params["att_b"], 1, E_pad)                    # (1, E_pad)
    embed = _pad_axis(params["embed"], 1, E_pad)                    # (V, E_pad)
    wa = _pad_axis(_pad_axis(params["wa"], 0, E_pad), 1, H_pad)     # (E_pad, H_pad)
    wh = _pad_axis(_pad_axis(params["wh"], 0, R_pad), 1, H_pad)     # (R_pad, H_pad)
    wv = _pad_axis(params["wv"], 1, H_pad)                          # (1, H_pad)
    wx = _pad_gate(params["wx"], E_pad, R, R_pad)                   # (E_pad, 4R_pad)
    wc = _pad_gate(params["wc"], E_pad, R, R_pad)
    whh = _pad_gate(params["whh"], R_pad, R, R_pad)
    wbig = jnp.concatenate([wx, wc, whh], axis=0)                   # (2E_pad+R_pad, 4R_pad)
    bl = _pad_gate(params["bl"], 1, R, R_pad)                       # (1, 4R_pad)
    wo = _pad_axis(_pad_axis(params["wo"], 0, R_pad), 1, V_pad)     # (R_pad, V_pad)
    if V_pad > V:
        bo = jnp.concatenate(
            [params["bo"], jnp.full((1, V_pad - V), -1e30, jnp.float32)], axis=1)
    else:
        bo = params["bo"]

    # --- att_embed: ReLU(Linear), Pallas kernel, output already E_pad lane-dense ---
    att_emb_flat = att_embed(att_feats.reshape(B * A, F), att_w, att_b)  # (B*A, E_pad)
    att_emb = att_emb_flat.reshape(B, A, E_pad)

    # --- token sequence: t=0 -> BOS(0); t>=1 -> labels[:, t-1] (teacher forcing) ---
    T1 = seq_length + 1
    tokens = jnp.concatenate(
        [jnp.zeros((B, 1), jnp.int32), labels[:, :seq_length].astype(jnp.int32)], axis=1)
    # single XLA gather for the whole sequence (no per-step dispatch)
    xt_all = jnp.take(embed, tokens.T, axis=0)                           # (T1, B, E_pad)

    # --- fused time loop (one pallas_call) ---
    lp = fused_core(xt_all, att_emb_flat, att_emb, wa, wh, wv, wbig, bl, wo, bo)

    # (T1, B, V_pad) -> (B, T1, V)
    return jnp.transpose(lp, (1, 0, 2))[:, :, :V]


# ---------------------------------------------------------------------------
if __name__ == "__main__":
    # Small "opt" consistent with the module.
    vocab_size = 15          # -> V = 16
    input_encoding_size = 32
    rnn_size = 32
    att_hidden = 16
    att_size = 8
    att_feat_size = 16
    seq_length = 6
    batch = 8

    key = jax.random.PRNGKey(0)
    k_par, k_feat, k_lab = jax.random.split(key, 3)

    params = init_params(k_par, vocab_size, input_encoding_size, rnn_size,
                         att_feat_size, att_hidden)

    att_feats = jax.random.normal(k_feat, (batch, att_size, att_feat_size),
                                  dtype=jnp.float32)
    labels = jax.random.randint(k_lab, (batch, seq_length), 1, vocab_size + 1,
                                dtype=jnp.int32)       # nonzero -> no early break

    fwd = jax.jit(more_atten_forward, static_argnums=3)
    out = fwd(att_feats, labels, params, seq_length)
    out = jax.block_until_ready(out)

    assert out.shape == (batch, seq_length + 1, vocab_size + 1), out.shape
    assert bool(jnp.all(jnp.isfinite(out)))
    # each row of logprobs should sum (in prob space) to ~1
    assert bool(jnp.allclose(jnp.sum(jnp.exp(out), axis=-1), 1.0, atol=1e-4))

    print("KERNEL_OK")
</pallas_src>

<mosaic_0001>
module attributes {stable_mosaic.version = 11 : i64} {
  func.func @_att_embed_kernel(%arg0: i32, %arg1: memref<64x16xf32, #tpu.memory_space<vmem>>, %arg2: memref<16x128xf32, #tpu.memory_space<vmem>>, %arg3: memref<1x128xf32, #tpu.memory_space<vmem>>, %arg4: memref<64x128xf32, #tpu.memory_space<vmem>>) attributes {dimension_semantics = [#tpu.dimension_semantics<parallel>], iteration_bounds = array<i64: 1>, scalar_prefetch = 0 : i64, scratch_operands = 0 : i64, tpu.core_type = #tpu.core_type<tc>, window_params = [{transform_indices = @transform_0, window_bounds = array<i64: 64, 16>}, {pipeline_mode = #tpu.pipeline_mode<synchronous>, transform_indices = @transform_1, window_bounds = array<i64: 16, 128>}, {pipeline_mode = #tpu.pipeline_mode<synchronous>, transform_indices = @transform_2, window_bounds = array<i64: 1, 128>}, {transform_indices = @transform_3, window_bounds = array<i64: 64, 128>}]} {
    %c0 = arith.constant 0 : index
    %c0_0 = arith.constant 0 : index
    %0 = vector.load %arg1[%c0, %c0_0] : memref<64x16xf32, #tpu.memory_space<vmem>>, vector<64x16xf32>
    %c0_1 = arith.constant 0 : index
    %c0_2 = arith.constant 0 : index
    %1 = vector.load %arg2[%c0_1, %c0_2] : memref<16x128xf32, #tpu.memory_space<vmem>>, vector<16x128xf32>
    %cst = arith.constant dense<0.000000e+00> : vector<64x128xf32>
    %2 = tpu.matmul %0, %1, %cst {dimension_numbers = #tpu.dot_dimension_numbers<[1], [0], [0], [1], [0, 0, 1, 1], [], []>} : vector<64x16xf32>, vector<16x128xf32>, vector<64x128xf32> -> vector<64x128xf32>
    %c0_3 = arith.constant 0 : index
    %c0_4 = arith.constant 0 : index
    %3 = vector.load %arg3[%c0_3, %c0_4] : memref<1x128xf32, #tpu.memory_space<vmem>>, vector<1x128xf32>
    %4 = vector.broadcast %3 : vector<1x128xf32> to vector<64x128xf32>
    %5 = arith.addf %2, %4 : vector<64x128xf32>
    %cst_5 = arith.constant 0.000000e+00 : f32
    %6 = vector.broadcast %cst_5 : f32 to vector<64x128xf32>
    %7 = arith.maximumf %5, %6 : vector<64x128xf32>
    %c0_6 = arith.constant 0 : index
    %c0_7 = arith.constant 0 : index
    %8 = vector.load %arg4[%c0_6, %c0_7] : memref<64x128xf32, #tpu.memory_space<vmem>>, vector<64x128xf32>
    tpu.vector_store %arg4[%c0_6, %c0_7], %7 {strides = array<i32>} : memref<64x128xf32, #tpu.memory_space<vmem>>, vector<64x128xf32>,
    return
  }
  func.func @transform_0(%arg0: i32) -> (i32, i32) {
    %c0_i32 = arith.constant 0 : i32
    %c0_i32_0 = arith.constant 0 : i32
    return %arg0, %c0_i32 : i32, i32
  }
  func.func @transform_1(%arg0: i32) -> (i32, i32) {
    %c0_i32 = arith.constant 0 : i32
    %c0_i32_0 = arith.constant 0 : i32
    %c0_i32_1 = arith.constant 0 : i32
    return %c0_i32, %c0_i32_0 : i32, i32
  }
  func.func @transform_2(%arg0: i32) -> (i32, i32) {
    %c0_i32 = arith.constant 0 : i32
    %c0_i32_0 = arith.constant 0 : i32
    %c0_i32_1 = arith.constant 0 : i32
    return %c0_i32, %c0_i32_0 : i32, i32
  }
  func.func @transform_3(%arg0: i32) -> (i32, i32) {
    %c0_i32 = arith.constant 0 : i32
    %c0_i32_0 = arith.constant 0 : i32
    return %arg0, %c0_i32 : i32, i32
  }
}

module attributes {stable_mosaic.version = 11 : i64} {
  func.func @_fused_core_kernel(%arg0: i32, %arg1: i32, %arg2: memref<1x8x128xf32, #tpu.memory_space<vmem>>, %arg3: memref<64x128xf32, #tpu.memory_space<vmem>>, %arg4: memref<8x8x128xf32, #tpu.memory_space<vmem>>, %arg5: memref<128x128xf32, #tpu.memory_space<vmem>>, %arg6: memref<128x128xf32, #tpu.memory_space<vmem>>, %arg7: memref<1x128xf32, #tpu.memory_space<vmem>>, %arg8: memref<384x512xf32, #tpu.memory_space<vmem>>, %arg9: memref<1x512xf32, #tpu.memory_space<vmem>>, %arg10: memref<128x128xf32, #tpu.memory_space<vmem>>, %arg11: memref<1x128xf32, #tpu.memory_space<vmem>>, %arg12: memref<1x8x128xf32, #tpu.memory_space<vmem>>, %arg13: memref<8x128xf32, #tpu.memory_space<vmem>>, %arg14: memref<8x128xf32, #tpu.memory_space<vmem>>) attributes {dimension_semantics = [#tpu.dimension_semantics<parallel>, #tpu.dimension_semantics<arbitrary>], iteration_bounds = array<i64: 1, 7>, scalar_prefetch = 0 : i64, scratch_operands = 2 : i64, tpu.core_type = #tpu.core_type<tc>, window_params = [{transform_indices = @transform_0, window_bounds = array<i64: 1, 8, 128>}, {transform_indices = @transform_1, window_bounds = array<i64: 64, 128>}, {transform_indices = @transform_2, window_bounds = array<i64: 8, 8, 128>}, {pipeline_mode = #tpu.pipeline_mode<synchronous>, transform_indices = @transform_3, window_bounds = array<i64: 128, 128>}, {pipeline_mode = #tpu.pipeline_mode<synchronous>, transform_indices = @transform_4, window_bounds = array<i64: 128, 128>}, {pipeline_mode = #tpu.pipeline_mode<synchronous>, transform_indices = @transform_5, window_bounds = array<i64: 1, 128>}, {pipeline_mode = #tpu.pipeline_mode<synchronous>, transform_indices = @transform_6, window_bounds = array<i64: 384, 512>}, {pipeline_mode = #tpu.pipeline_mode<synchronous>, transform_indices = @transform_7, window_bounds = array<i64: 1, 512>}, {pipeline_mode = #tpu.pipeline_mode<synchronous>, transform_indices = @transform_8, window_bounds = array<i64: 128, 128>}, {pipeline_mode = #tpu.pipeline_mode<synchronous>, transform_indices = @transform_9, window_bounds = array<i64: 1, 128>}, {transform_indices = @transform_10, window_bounds = array<i64: 1, 8, 128>}]} {
    %c0_i32 = arith.constant 0 : i32
    %0 = arith.cmpi eq, %arg1, %c0_i32 : i32
    %1 = arith.extui %0 : i1 to i32
    %c0_i32_0 = arith.constant 0 : i32
    %2 = arith.cmpi ne, %1, %c0_i32_0 : i32
    scf.if %2 {
      %cst_45 = arith.constant 0.000000e+00 : f32
      %89 = vector.broadcast %cst_45 : f32 to vector<8x128xf32>
      %c0_46 = arith.constant 0 : index
      %c0_47 = arith.constant 0 : index
      %90 = vector.load %arg13[%c0_46, %c0_47] : memref<8x128xf32, #tpu.memory_space<vmem>>, vector<8x128xf32>
      tpu.vector_store %arg13[%c0_46, %c0_47], %89 {strides = array<i32>} : memref<8x128xf32, #tpu.memory_space<vmem>>, vector<8x128xf32>,
      %cst_48 = arith.constant 0.000000e+00 : f32
      %91 = vector.broadcast %cst_48 : f32 to vector<8x128xf32>
      %c0_49 = arith.constant 0 : index
      %c0_50 = arith.constant 0 : index
      %92 = vector.load %arg14[%c0_49, %c0_50] : memref<8x128xf32, #tpu.memory_space<vmem>>, vector<8x128xf32>
      tpu.vector_store %arg14[%c0_49, %c0_50], %91 {strides = array<i32>} : memref<8x128xf32, #tpu.memory_space<vmem>>, vector<8x128xf32>,
    } else {
    }
    %c0 = arith.constant 0 : index
    %c0_1 = arith.constant 0 : index
    %c0_2 = arith.constant 0 : index
    %3 = vector.load %arg2[%c0, %c0_1, %c0_2] : memref<1x8x128xf32, #tpu.memory_space<vmem>>, vector<1x8x128xf32>
    %4 = vector.shape_cast %3 : vector<1x8x128xf32> to vector<8x128xf32>
    %c0_3 = arith.constant 0 : index
    %c0_4 = arith.constant 0 : index
    %5 = vector.load %arg13[%c0_3, %c0_4] : memref<8x128xf32, #tpu.memory_space<vmem>>, vector<8x128xf32>
    %c0_5 = arith.constant 0 : index
    %c0_6 = arith.constant 0 : index
    %6 = vector.load %arg14[%c0_5, %c0_6] : memref<8x128xf32, #tpu.memory_space<vmem>>, vector<8x128xf32>
    %c0_7 = arith.constant 0 : index
    %c0_8 = arith.constant 0 : index
    %c0_9 = arith.constant 0 : index
    %7 = vector.load %arg4[%c0_7, %c0_8, %c0_9] : memref<8x8x128xf32, #tpu.memory_space<vmem>>, vector<8x8x128xf32>
    %c0_10 = arith.constant 0 : index
    %c0_11 = arith.constant 0 : index
    %8 = vector.load %arg3[%c0_10, %c0_11] : memref<64x128xf32, #tpu.memory_space<vmem>>, vector<64x128xf32>
    %c0_12 = arith.constant 0 : index
    %c0_13 = arith.constant 0 : index
    %9 = vector.load %arg5[%c0_12, %c0_13] : memref<128x128xf32, #tpu.memory_space<vmem>>, vector<128x128xf32>
    %cst = arith.constant dense<0.000000e+00> : vector<64x128xf32>
    %10 = tpu.matmul %8, %9, %cst {dimension_numbers = #tpu.dot_dimension_numbers<[1], [0], [0], [1], [0, 0, 1, 1], [], []>} : vector<64x128xf32>, vector<128x128xf32>, vector<64x128xf32> -> vector<64x128xf32>
    %11 = vector.shape_cast %10 : vector<64x128xf32> to vector<8x8x128xf32>
    %c0_14 = arith.constant 0 : index
    %c0_15 = arith.constant 0 : index
    %12 = vector.load %arg6[%c0_14, %c0_15] : memref<128x128xf32, #tpu.memory_space<vmem>>, vector<128x128xf32>
    %cst_16 = arith.constant dense<0.000000e+00> : vector<8x128xf32>
    %13 = tpu.matmul %5, %12, %cst_16 {dimension_numbers = #tpu.dot_dimension_numbers<[1], [0], [0], [1], [0, 0, 1, 1], [], []>} : vector<8x128xf32>, vector<128x128xf32>, vector<8x128xf32> -> vector<8x128xf32>
    %14 = vector.shape_cast %13 : vector<8x128xf32> to vector<8x1x128xf32>
    %15 = vector.broadcast %14 : vector<8x1x128xf32> to vector<8x8x128xf32>
    %16 = arith.addf %11, %15 : vector<8x8x128xf32>
    %17 = math.tanh %16 : vector<8x8x128xf32>
    %c0_17 = arith.constant 0 : index
    %c0_18 = arith.constant 0 : index
    %18 = vector.load %arg7[%c0_17, %c0_18] : memref<1x128xf32, #tpu.memory_space<vmem>>, vector<1x128xf32>
    %19 = vector.shape_cast %18 : vector<1x128xf32> to vector<1x1x128xf32>
    %20 = vector.broadcast %19 : vector<1x1x128xf32> to vector<8x8x128xf32>
    %21 = arith.mulf %17, %20 : vector<8x8x128xf32>
    %cst_19 = arith.constant dense<0.000000e+00> : vector<8x8xf32>
    %22 = vector.multi_reduction <add>, %21, %cst_19 [2] : vector<8x8x128xf32> to vector<8x8xf32>
    %cst_20 = arith.constant dense<0xFF800000> : vector<8xf32>
    %23 = vector.multi_reduction <maximumf>, %22, %cst_20 [1] : vector<8x8xf32> to vector<8xf32>
    %24 = vector.shape_cast %23 : vector<8xf32> to vector<8x1xf32>
    %25 = vector.broadcast %24 : vector<8x1xf32> to vector<8x8xf32>
    %26 = arith.subf %22, %25 : vector<8x8xf32>
    %27 = math.exp %26 : vector<8x8xf32>
    %cst_21 = arith.constant dense<0.000000e+00> : vector<8xf32>
    %28 = vector.multi_reduction <add>, %27, %cst_21 [1] : vector<8x8xf32> to vector<8xf32>
    %29 = vector.shape_cast %28 : vector<8xf32> to vector<8x1xf32>
    %30 = tpu.reciprocal %29 {approx = true} : vector<8x1xf32> -> vector<8x1xf32>
    %31 = vector.broadcast %30 : vector<8x1xf32> to vector<8x8xf32>
    %32 = arith.mulf %27, %31 : vector<8x8xf32>
    %33 = vector.shape_cast %32 : vector<8x8xf32> to vector<8x8x1xf32>
    %34 = vector.broadcast %33 : vector<8x8x1xf32> to vector<8x8x128xf32>
    %35 = arith.mulf %34, %7 : vector<8x8x128xf32>
    %cst_22 = arith.constant dense<0.000000e+00> : vector<8x128xf32>
    %36 = vector.multi_reduction <add>, %35, %cst_22 [1] : vector<8x8x128xf32> to vector<8x128xf32>
    %37 = tpu.concatenate %4, %36, %5 in 1 : vector<8x128xf32>, vector<8x128xf32>, vector<8x128xf32> -> vector<8x384xf32>
    %c0_23 = arith.constant 0 : index
    %c0_24 = arith.constant 0 : index
    %38 = vector.load %arg8[%c0_23, %c0_24] : memref<384x512xf32, #tpu.memory_space<vmem>>, vector<384x512xf32>
    %cst_25 = arith.constant dense<0.000000e+00> : vector<8x512xf32>
    %39 = tpu.matmul %37, %38, %cst_25 {dimension_numbers = #tpu.dot_dimension_numbers<[1], [0], [0], [1], [0, 0, 1, 1], [], []>} : vector<8x384xf32>, vector<384x512xf32>, vector<8x512xf32> -> vector<8x512xf32>
    %c0_26 = arith.constant 0 : index
    %c0_27 = arith.constant 0 : index
    %40 = vector.load %arg9[%c0_26, %c0_27] : memref<1x512xf32, #tpu.memory_space<vmem>>, vector<1x512xf32>
    %41 = vector.broadcast %40 : vector<1x512xf32> to vector<8x512xf32>
    %42 = arith.addf %39, %41 : vector<8x512xf32>
    %43 = vector.extract_strided_slice %42 {offsets = [0, 0], sizes = [8, 128], strides = [1, 1]} : vector<8x512xf32> to vector<8x128xf32>
    %44 = arith.negf %43 : vector<8x128xf32>
    %45 = math.exp %44 : vector<8x128xf32>
    %cst_28 = arith.constant 1.000000e+00 : f32
    %46 = vector.broadcast %cst_28 : f32 to vector<8x128xf32>
    %47 = arith.addf %46, %45 : vector<8x128xf32>
    %48 = arith.divf %46, %47 : vector<8x128xf32>
    %49 = vector.extract_strided_slice %42 {offsets = [0, 128], sizes = [8, 128], strides = [1, 1]} : vector<8x512xf32> to vector<8x128xf32>
    %50 = arith.negf %49 : vector<8x128xf32>
    %51 = math.exp %50 : vector<8x128xf32>
    %cst_29 = arith.constant 1.000000e+00 : f32
    %52 = vector.broadcast %cst_29 : f32 to vector<8x128xf32>
    %53 = arith.addf %52, %51 : vector<8x128xf32>
    %54 = arith.divf %52, %53 : vector<8x128xf32>
    %55 = vector.extract_strided_slice %42 {offsets = [0, 256], sizes = [8, 128], strides = [1, 1]} : vector<8x512xf32> to vector<8x128xf32>
    %56 = arith.negf %55 : vector<8x128xf32>
    %57 = math.exp %56 : vector<8x128xf32>
    %cst_30 = arith.constant 1.000000e+00 : f32
    %58 = vector.broadcast %cst_30 : f32 to vector<8x128xf32>
    %59 = arith.addf %58, %57 : vector<8x128xf32>
    %60 = arith.divf %58, %59 : vector<8x128xf32>
    %61 = vector.extract_strided_slice %42 {offsets = [0, 384], sizes = [8, 128], strides = [1, 1]} : vector<8x512xf32> to vector<8x128xf32>
    %62 = math.tanh %61 : vector<8x128xf32>
    %63 = arith.mulf %54, %6 : vector<8x128xf32>
    %64 = arith.mulf %48, %62 : vector<8x128xf32>
    %65 = arith.addf %63, %64 : vector<8x128xf32>
    %66 = math.tanh %65 : vector<8x128xf32>
    %67 = arith.mulf %60, %66 : vector<8x128xf32>
    %c0_31 = arith.constant 0 : index
    %c0_32 = arith.constant 0 : index
    %68 = vector.load %arg13[%c0_31, %c0_32] : memref<8x128xf32, #tpu.memory_space<vmem>>, vector<8x128xf32>
    tpu.vector_store %arg13[%c0_31, %c0_32], %67 {strides = array<i32>} : memref<8x128xf32, #tpu.memory_space<vmem>>, vector<8x128xf32>,
    %c0_33 = arith.constant 0 : index
    %c0_34 = arith.constant 0 : index
    %69 = vector.load %arg14[%c0_33, %c0_34] : memref<8x128xf32, #tpu.memory_space<vmem>>, vector<8x128xf32>
    tpu.vector_store %arg14[%c0_33, %c0_34], %65 {strides = array<i32>} : memref<8x128xf32, #tpu.memory_space<vmem>>, vector<8x128xf32>,
    %c0_35 = arith.constant 0 : index
    %c0_36 = arith.constant 0 : index
    %70 = vector.load %arg10[%c0_35, %c0_36] : memref<128x128xf32, #tpu.memory_space<vmem>>, vector<128x128xf32>
    %cst_37 = arith.constant dense<0.000000e+00> : vector<8x128xf32>
    %71 = tpu.matmul %67, %70, %cst_37 {dimension_numbers = #tpu.dot_dimension_numbers<[1], [0], [0], [1], [0, 0, 1, 1], [], []>} : vector<8x128xf32>, vector<128x128xf32>, vector<8x128xf32> -> vector<8x128xf32>
    %c0_38 = arith.constant 0 : index
    %c0_39 = arith.constant 0 : index
    %72 = vector.load %arg11[%c0_38, %c0_39] : memref<1x128xf32, #tpu.memory_space<vmem>>, vector<1x128xf32>
    %73 = vector.broadcast %72 : vector<1x128xf32> to vector<8x128xf32>
    %74 = arith.addf %71, %73 : vector<8x128xf32>
    %cst_40 = arith.constant dense<0xFF800000> : vector<8xf32>
    %75 = vector.multi_reduction <maximumf>, %74, %cst_40 [1] : vector<8x128xf32> to vector<8xf32>
    %76 = vector.shape_cast %75 : vector<8xf32> to vector<8x1xf32>
    %77 = vector.broadcast %76 : vector<8x1xf32> to vector<8x128xf32>
    %78 = arith.subf %74, %77 : vector<8x128xf32>
    %79 = math.exp %78 : vector<8x128xf32>
    %cst_41 = arith.constant dense<0.000000e+00> : vector<8xf32>
    %80 = vector.multi_reduction <add>, %79, %cst_41 [1] : vector<8x128xf32> to vector<8xf32>
    %81 = vector.shape_cast %80 : vector<8xf32> to vector<8x1xf32>
    %82 = math.log %81 : vector<8x1xf32>
    %83 = arith.addf %76, %82 : vector<8x1xf32>
    %84 = vector.broadcast %83 : vector<8x1xf32> to vector<8x128xf32>
    %85 = arith.subf %74, %84 : vector<8x128xf32>
    %c0_42 = arith.constant 0 : index
    %c0_43 = arith.constant 0 : index
    %c0_44 = arith.constant 0 : index
    %86 = vector.load %arg12[%c0_42, %c0_43, %c0_44] : memref<1x8x128xf32, #tpu.memory_space<vmem>>, vector<1x8x128xf32>
    %87 = vector.shape_cast %86 : vector<1x8x128xf32> to vector<8x128xf32>
    %88 = vector.shape_cast %85 : vector<8x128xf32> to vector<1x8x128xf32>
    tpu.vector_store %arg12[%c0_42, %c0_43, %c0_44], %88 {strides = array<i32>} : memref<1x8x128xf32, #tpu.memory_space<vmem>>, vector<1x8x128xf32>,
    return
  }
  func.func @transform_0(%arg0: i32, %arg1: i32) -> (i32, i32, i32) {
    %c0_i32 = arith.constant 0 : i32
    %c0_i32_0 = arith.constant 0 : i32
    return %arg1, %arg0, %c0_i32 : i32, i32, i32
  }
  func.func @transform_1(%arg0: i32, %arg1: i32) -> (i32, i32) {
    %c0_i32 = arith.constant 0 : i32
    %c0_i32_0 = arith.constant 0 : i32
    return %arg0, %c0_i32 : i32, i32
  }
  func.func @transform_2(%arg0: i32, %arg1: i32) -> (i32, i32, i32) {
    %c0_i32 = arith.constant 0 : i32
    %c0_i32_0 = arith.constant 0 : i32
    %c0_i32_1 = arith.constant 0 : i32
    return %arg0, %c0_i32, %c0_i32_0 : i32, i32, i32
  }
  func.func @transform_3(%arg0: i32, %arg1: i32) -> (i32, i32) {
    %c0_i32 = arith.constant 0 : i32
    %c0_i32_0 = arith.constant 0 : i32
    %c0_i32_1 = arith.constant 0 : i32
    return %c0_i32, %c0_i32_0 : i32, i32
  }
  func.func @transform_4(%arg0: i32, %arg1: i32) -> (i32, i32) {
    %c0_i32 = arith.constant 0 : i32
    %c0_i32_0 = arith.constant 0 : i32
    %c0_i32_1 = arith.constant 0 : i32
    return %c0_i32, %c0_i32_0 : i32, i32
  }
  func.func @transform_5(%arg0: i32, %arg1: i32) -> (i32, i32) {
    %c0_i32 = arith.constant 0 : i32
    %c0_i32_0 = arith.constant 0 : i32
    %c0_i32_1 = arith.constant 0 : i32
    return %c0_i32, %c0_i32_0 : i32, i32
  }
  func.func @transform_6(%arg0: i32, %arg1: i32) -> (i32, i32) {
    %c0_i32 = arith.constant 0 : i32
    %c0_i32_0 = arith.constant 0 : i32
    %c0_i32_1 = arith.constant 0 : i32
    return %c0_i32, %c0_i32_0 : i32, i32
  }
  func.func @transform_7(%arg0: i32, %arg1: i32) -> (i32, i32) {
    %c0_i32 = arith.constant 0 : i32
    %c0_i32_0 = arith.constant 0 : i32
    %c0_i32_1 = arith.constant 0 : i32
    return %c0_i32, %c0_i32_0 : i32, i32
  }
  func.func @transform_8(%arg0: i32, %arg1: i32) -> (i32, i32) {
    %c0_i32 = arith.constant 0 : i32
    %c0_i32_0 = arith.constant 0 : i32
    %c0_i32_1 = arith.constant 0 : i32
    return %c0_i32, %c0_i32_0 : i32, i32
  }
  func.func @transform_9(%arg0: i32, %arg1: i32) -> (i32, i32) {
    %c0_i32 = arith.constant 0 : i32
    %c0_i32_0 = arith.constant 0 : i32
    %c0_i32_1 = arith.constant 0 : i32
    return %c0_i32, %c0_i32_0 : i32, i32
  }
  func.func @transform_10(%arg0: i32, %arg1: i32) -> (i32, i32, i32) {
    %c0_i32 = arith.constant 0 : i32
    %c0_i32_0 = arith.constant 0 : i32
    return %arg1, %arg0, %c0_i32 : i32, i32, i32
  }
}

</mosaic_0001>

<llo_original>
// kernel: more_atten_forward.2
$region0: #{more_atten_forward.2}
  #allocation0 [shape = 'u32[]', space=smem, size = 0x4, offset = 0x4, fixed_abs, tag = 'smem constant byte address 0x4 - core index']
  #allocation1 [shape = 'u32[144,128]{1,0:T(1,128)}', space=vmem, size = 0x12000, scoped, tag = 'internal scratch']
  %s0 = inlined_call_operand.vmem [shape: f32[64,16], index: 0, kind: input, shape index: {}]
  %s1 = inlined_call_operand.vmem [shape: f32[16,128], index: 1, kind: input, shape index: {}]
  %s2 = inlined_call_operand.vmem [shape: f32[1,128], index: 2, kind: input, shape index: {}]
  %s3 = inlined_call_operand.hbm [shape: f32[64,128], index: 3, kind: output, shape index: {}]
  %s4 = sld [smem:[#allocation0]]
  $region22: #{more_atten_forward.2} parent=0
    _
  %s6 = ssub.s32 1, %s4
  %s7 = scalar_select 0, %s6, %s4
  $region1: #{more_atten_forward.2} parent=0
    #allocation2 [shape = 'u8[32768]{0}', space=vmem, size = 0x8000, scoped, tag = 'output window, operand 0, single buffered']
    #allocation3 [shape = 's32[1]{0}', space=sflag, size = 0x4, scoped, tag = 'scoped memory for more_atten_forward.2']
    %8 = vsyncpa [#allocation3], 0
    // Predicated region
    $region2: #{more_atten_forward.2} parent=1 // pred_check
      _
    $region3: #{more_atten_forward.2} parent=1 // pred_check_branch
      %10 = sbr.rel (0) target = $region5
    $region4: #{more_atten_forward.2} parent=1 // pred_region
      _
    $region5: #{more_atten_forward.2} parent=1 // pred_fallthru
      _
    // Predicated region
    $region6: #{more_atten_forward.2} parent=1 // pred_check
      _
    $region7: #{more_atten_forward.2} parent=1 // pred_check_branch
      %12 = sbr.rel (0) target = $region9
    $region8: #{more_atten_forward.2} parent=1 // pred_region
      _
    $region9: #{more_atten_forward.2} parent=1 // pred_fallthru
      _
    // Predicated region
    $region10: #{more_atten_forward.2} parent=1 // pred_check
      _
    $region11: #{more_atten_forward.2} parent=1 // pred_check_branch
      %14 = sbr.rel (0) target = $region13
    $region12: #{more_atten_forward.2} parent=1 // pred_region
      _
    $region13: #{more_atten_forward.2} parent=1 // pred_fallthru
      _
    %v15 = vld [vmem:[%s0] sm:$0xff]
    %v16 = vld [vmem:[%s0 + $0x8] sm:$0xff]
    %v17 = vld [vmem:[%s0 + $0x10] sm:$0xff]
    %v18 = vld [vmem:[%s0 + $0x18] sm:$0xff]
    %v19 = vld [vmem:[%s0 + $0x20] sm:$0xff]
    %v20 = vld [vmem:[%s0 + $0x28] sm:$0xff]
    %v21 = vld [vmem:[%s0 + $0x30] sm:$0xff]
    %v22 = vld [vmem:[%s0 + $0x38] sm:$0xff]
    %v23 = vld [vmem:[%s1] sm:$0xff]
    %v24 = vld [vmem:[%s1 + $0x8] sm:$0xff]
    %v25 = vld [vmem:[%s2] sm:$0x1]
    %v27 = vlaneseq
    %v28 = vshrl.u32 %v27, 7
    %v29 = vsub.s32 0, %v28
    %v30 = vrot.slane %v25, %v29
    %vm32 = vcmask 130048
    %v34 = vsel %vm32, %v15, 0
    %v37 = vsel %vm32, %v16, 0
    %v40 = vsel %vm32, %v17, 0
    %v43 = vsel %vm32, %v18, 0
    %v46 = vsel %vm32, %v19, 0
    %v49 = vsel %vm32, %v20, 0
    %v52 = vsel %vm32, %v21, 0
    %v55 = vsel %vm32, %v22, 0
    %57 = vmatprep.subr.mxu0 0.0
    %58 = vmatpush1.msra.mxu0 %v23
    %59 = vmatprep.subr.mxu0 0.0
    %60 = vmatpush1.msra.mxu0 %v24
    %61 = vmatprep.subr.mxu0 0.0
    %62 = vmatpush1.msra.mxu0 0.0
    %63 = vmatprep.subr.mxu0 0.0
    %64 = vmatpush1.msra.mxu0 0.0
    %65 = vmatprep.subr.mxu0 0.0
    %66 = vmatpush1.msra.mxu0 0.0
    %67 = vmatprep.subr.mxu0 0.0
    %68 = vmatpush1.msra.mxu0 0.0
    %69 = vmatprep.subr.mxu0 0.0
    %70 = vmatpush1.msra.mxu0 0.0
    %71 = vmatprep.subr.mxu0 0.0
    %72 = vmatpush1.msra.mxu0 0.0
    %73 = vmatprep.subr.mxu0 0.0
    %74 = vmatpush1.msra.mxu0 0.0
    %75 = vmatprep.subr.mxu0 0.0
    %76 = vmatpush1.msra.mxu0 0.0
    %77 = vmatprep.subr.mxu0 0.0
    %78 = vmatpush1.msra.mxu0 0.0
    %79 = vmatprep.subr.mxu0 0.0
    %80 = vmatpush1.msra.mxu0 0.0
    %81 = vmatprep.subr.mxu0 0.0
    %82 = vmatpush1.msra.mxu0 0.0
    %83 = vmatprep.subr.mxu0 0.0
    %84 = vmatpush1.msra.mxu0 0.0
    %85 = vmatprep.subr.mxu0 0.0
    %86 = vmatpush1.msra.mxu0 0.0
    %87 = vmatprep.subr.mxu0 0.0
    %88 = vmatpush1.msra.mxu0 0.0
    %89 = vmatprep.subr.mxu0 0.0
    %90 = vmatpush1.msra.mxu0 0.0
    %91 = vmatprep.subr.mxu0 0.0
    %92 = vmatpush1.msra.mxu0 0.0
    %93 = vmatprep.subr.mxu0 0.0
    %94 = vmatpush1.msra.mxu0 0.0
    %95 = vmatprep.subr.mxu0 0.0
    %96 = vmatpush1.msra.mxu0 0.0
    %97 = vmatprep.subr.mxu0 0.0
    %98 = vmatpush1.msra.mxu0 0.0
    %99 = vmatprep.subr.mxu0 0.0
    %100 = vmatpush1.msra.mxu0 0.0
    %101 = vmatprep.subr.mxu0 0.0
    %102 = vmatpush1.msra.mxu0 0.0
    %103 = vmatprep.subr.mxu0 0.0
    %104 = vmatpush1.msra.mxu0 0.0
    %105 = vmatprep.subr.mxu0 0.0
    %106 = vmatpush1.msra.mxu0 0.0
    %107 = vmatprep.subr.mxu0 0.0
    %108 = vmatpush1.msra.mxu0 0.0
    %109 = vmatprep.subr.mxu0 0.0
    %110 = vmatpush1.msra.mxu0 0.0
    %111 = vmatprep.subr.mxu0 0.0
    %112 = vmatpush1.msra.mxu0 0.0
    %113 = vmatprep.subr.mxu0 0.0
    %114 = vmatpush1.msra.mxu0 0.0
    %115 = vmatprep.subr.mxu0 0.0
    %116 = vmatpush1.msra.mxu0 0.0
    %117 = vmatprep.subr.mxu0 0.0
    %118 = vmatpush1.msra.mxu0 0.0
    %119 = vmatprep.subr.mxu0 0.0
    %120 = vmatpush1.msra.mxu0 0.0
    %121 = vmatprep.mubr.f32.mxu0 0.0
    %122 = vmatmul.mubr.f32.gmra.mrb[0].mxu0 %v34
    %v123 = vpop.f32.mrb[0].mxu0
    %v124 = vadd.f32 %v30, %v123
    %v125 = vpop.f32.mrb[0].mxu0
    %126 = vmatprep.mubr.f32.mxu0 0.0
    %127 = vmatmul.mubr.f32.gmra.mrb[0].mxu0 %v37
    %v128 = vpop.f32.mrb[0].mxu0
    %v129 = vadd.f32 %v30, %v128
    %v130 = vpop.f32.mrb[0].mxu0
    %131 = vmatprep.mubr.f32.mxu0 0.0
    %132 = vmatmul.mubr.f32.gmra.mrb[0].mxu0 %v40
    %v133 = vpop.f32.mrb[0].mxu0
    %v134 = vadd.f32 %v30, %v133
    %v135 = vpop.f32.mrb[0].mxu0
    %136 = vmatprep.mubr.f32.mxu0 0.0
    %137 = vmatmul.mubr.f32.gmra.mrb[0].mxu0 %v43
    %v138 = vpop.f32.mrb[0].mxu0
    %v139 = vadd.f32 %v30, %v138
    %v140 = vpop.f32.mrb[0].mxu0
    %141 = vmatprep.mubr.f32.mxu0 0.0
    %142 = vmatmul.mubr.f32.gmra.mrb[0].mxu0 %v46
    %v143 = vpop.f32.mrb[0].mxu0
    %v144 = vadd.f32 %v30, %v143
    %v145 = vpop.f32.mrb[0].mxu0
    %146 = vmatprep.mubr.f32.mxu0 0.0
    %147 = vmatmul.mubr.f32.gmra.mrb[0].mxu0 %v49
    %v148 = vpop.f32.mrb[0].mxu0
    %v149 = vadd.f32 %v30, %v148
    %v150 = vpop.f32.mrb[0].mxu0
    %151 = vmatprep.mubr.f32.mxu0 0.0
    %152 = vmatmul.mubr.f32.gmra.mrb[0].mxu0 %v52
    %v153 = vpop.f32.mrb[0].mxu0
    %v154 = vadd.f32 %v30, %v153
    %v155 = vpop.f32.mrb[0].mxu0
    %156 = vmatprep.mubr.f32.mxu0 0.0
    %157 = vmatmul.mubr.f32.gmra.mrb[0].mxu0 %v55
    %v158 = vpop.f32.mrb[0].mxu0
    %v159 = vadd.f32 %v30, %v158
    %v160 = vpop.f32.mrb[0].mxu0
    %161 = vdwg.mxu0
    %v162 = vmax.f32 %v124, 0.0
    %v163 = vmax.f32 %v129, 0.0
    %v164 = vmax.f32 %v134, 0.0
    %v165 = vmax.f32 %v139, 0.0
    %v166 = vmax.f32 %v144, 0.0
    %v167 = vmax.f32 %v149, 0.0
    %v168 = vmax.f32 %v154, 0.0
    %v169 = vmax.f32 %v159, 0.0
    %170 = vst [vmem:[#allocation2] sm:$0xff] %v162
    %171 = vst [vmem:[#allocation2 + $0x8] sm:$0xff] %v163
    %172 = vst [vmem:[#allocation2 + $0x10] sm:$0xff] %v164
    %173 = vst [vmem:[#allocation2 + $0x18] sm:$0xff] %v165
    %174 = vst [vmem:[#allocation2 + $0x20] sm:$0xff] %v166
    %175 = vst [vmem:[#allocation2 + $0x28] sm:$0xff] %v167
    %176 = vst [vmem:[#allocation2 + $0x30] sm:$0xff] %v168
    %177 = vst [vmem:[#allocation2 + $0x38] sm:$0xff] %v169
    // Predicated region
    $region14: #{more_atten_forward.2} parent=1 // pred_check
      _
    $region15: #{more_atten_forward.2} parent=1 // pred_check_branch
      %179 = sbr.rel (0) target = $region17
    $region16: #{more_atten_forward.2} parent=1 // pred_region
      %s181 = ssub.s32 1024, 1024
      %182 = vsyncadd [#allocation3], %s181
      %s183 = sshll.u32 [#allocation2], 4
      %s184 = int_to_ptr.vmem [resolvable:$true] %s183
      %189 = dma.vmem_to_hbm [thread:$0]  %s184, 1024, %s3, [#allocation3], 128, 128, 8
    $region17: #{more_atten_forward.2} parent=1 // pred_fallthru
      _
    // Predicated region
    $region18: #{more_atten_forward.2} parent=1 // pred_check
      _
    $region19: #{more_atten_forward.2} parent=1 // pred_check_branch
      %191 = sbr.rel (0) target = $region21
    $region20: #{more_atten_forward.2} parent=1 // pred_region
      %192 = dma.done [#allocation3], 1024
    $region21: #{more_atten_forward.2} parent=1 // pred_fallthru
      _
    %193 = vsyncpa [#allocation3], 1

// kernel: more_atten_forward.3
$region0: #{more_atten_forward.3}
  #allocation0 [shape = 'u32[]', space=smem, size = 0x4, offset = 0x4, fixed_abs, tag = 'smem constant byte address 0x4 - core index']
  #allocation1 [shape = 'u32[144,128]{1,0:T(1,128)}', space=vmem, size = 0x12000, scoped, tag = 'internal scratch']
  #allocation2 [shape = 'f32[8,128]{1,0:T(8,128)}', space=vmem, size = 0x1000, scoped, tag = 'scratch operand']
  #allocation3 [shape = 'f32[8,128]{1,0:T(8,128)}', space=vmem, size = 0x1000, scoped, tag = 'scratch operand']
  %s0 = inlined_call_operand.hbm [shape: f32[7,8,128], index: 0, kind: input, shape index: {}]
  %s1 = inlined_call_operand.hbm [shape: f32[64,128], index: 1, kind: input, shape index: {}, may-alias: {1,2}]
  %s2 = inlined_call_operand.hbm [shape: f32[8,8,128], index: 2, kind: input, shape index: {}, may-alias: {1,2}]
  %s3 = inlined_call_operand.hbm [shape: f32[128,128], index: 3, kind: input, shape index: {}]
  %s4 = inlined_call_operand.hbm [shape: f32[128,128], index: 4, kind: input, shape index: {}]
  %s5 = inlined_call_operand.hbm [shape: f32[1,128], index: 5, kind: input, shape index: {}]
  %s6 = inlined_call_operand.hbm [shape: f32[384,512], index: 6, kind: input, shape index: {}]
  %s7 = inlined_call_operand.hbm [shape: f32[1,512], index: 7, kind: input, shape index: {}]
  %s8 = inlined_call_operand.hbm [shape: f32[128,128], index: 8, kind: input, shape index: {}]
  %s9 = inlined_call_operand.hbm [shape: f32[1,128], index: 9, kind: input, shape index: {}]
  %s10 = inlined_call_operand.hbm [shape: f32[7,8,128], index: 10, kind: output, shape index: {}]
  %s11 = sld [smem:[#allocation0]]
  $region117: #{more_atten_forward.3} parent=0
    _
  %s13 = ssub.s32 1, %s11
  %s14 = scalar_select 0, %s13, %s11
  $region1: #{more_atten_forward.3} parent=0
    #allocation4 [shape = 'u8[8192]{0}', space=vmem, size = 0x2000, scoped, tag = 'input window, operand 0']
    #allocation5 [shape = 's32[2]{0}', space=sflag, size = 0x8, scoped, tag = 'scoped memory for more_atten_forward.3']
    #allocation6 [shape = 's32[2]{0}', space=sflag, size = 0x8, scoped, tag = 'scoped memory for more_atten_forward.3']
    #allocation7 [shape = 'u8[32768]{0}', space=vmem, size = 0x8000, scoped, tag = 'input window, operand 1, single buffered']
    #allocation8 [shape = 's32[1]{0}', space=sflag, size = 0x4, scoped, tag = 'scoped memory for more_atten_forward.3']
    #allocation9 [shape = 'u8[32768]{0}', space=vmem, size = 0x8000, scoped, tag = 'input window, operand 2, single buffered']
    #allocation10 [shape = 'u8[65536]{0}', space=vmem, size = 0x10000, scoped, tag = 'input window, operand 3, single buffered']
    #allocation11 [shape = 's32[1]{0}', space=sflag, size = 0x4, scoped, tag = 'scoped memory for more_atten_forward.3']
    #allocation12 [shape = 'u8[65536]{0}', space=vmem, size = 0x10000, scoped, tag = 'input window, operand 4, single buffered']
    #allocation13 [shape = 'u8[512]{0}', space=vmem, size = 0x400, scoped, tag = 'input window, operand 5, single buffered']
    #allocation14 [shape = 's32[1]{0}', space=sflag, size = 0x4, scoped, tag = 'scoped memory for more_atten_forward.3']
    #allocation15 [shape = 'u8[786432]{0}', space=vmem, size = 0xc0000, scoped, tag = 'input window, operand 6, single buffered']
    #allocation16 [shape = 'u8[2048]{0}', space=vmem, size = 0x800, scoped, tag = 'input window, operand 7, single buffered']
    #allocation17 [shape = 's32[1]{0}', space=sflag, size = 0x4, scoped, tag = 'scoped memory for more_atten_forward.3']
    #allocation18 [shape = 'u8[65536]{0}', space=vmem, size = 0x10000, scoped, tag = 'input window, operand 8, single buffered']
    #allocation19 [shape = 'u8[512]{0}', space=vmem, size = 0x400, scoped, tag = 'input window, operand 9, single buffered']
    #allocation20 [shape = 's32[1]{0}', space=sflag, size = 0x4, scoped, tag = 'scoped memory for more_atten_forward.3']
    #allocation21 [shape = 'u8[8192]{0}', space=vmem, size = 0x2000, scoped, tag = 'output window, operand 0']
    %15 = vsyncpa [#allocation5], 0
    %s16 = scalar_lea.sflag [#allocation5], 1
    %17 = vsyncpa %s16, 0
    %18 = vsyncpa [#allocation8], 0
    %19 = vsyncpa [#allocation11], 0
    %20 = vsyncpa [#allocation14], 0
    %21 = vsyncpa [#allocation17], 0
    %22 = vsyncpa [#allocation20], 0
    %23 = vsyncpa [#allocation6], 0
    %s24 = scalar_lea.sflag [#allocation6], 1
    %25 = vsyncpa %s24, 0
    loop: start=0, step=1, limit=9
    $region2: #{more_atten_forward.3} parent=1 // loop_pre_header
      _
    $region3: #{more_atten_forward.3} parent=1 // loop_header
      %s27 = sphi 0, %s31
      %p28 = scmp.ge.s32.totalorder %s27, 9
      %s34 = sphi 0, %s46
      %s35 = sphi 0, %s42
      %s36 = sphi 0, %s34
      %s37 = sphi 0, %s35
      %s38 = sphi 0, %s36
      %s39 = sphi 0, %s37
      %s51 = sphi 0, %s53
      %s54 = sphi 0, %s51
      %s55 = sphi 0, %s54
      %s71 = sphi 0, %s55
      %s77 = sphi 0, %s79
      %s80 = sphi 0, %s77
      %s81 = sphi 0, %s80
      %s97 = sphi 0, %s81
      %s103 = sphi 0, %s105
      %s106 = sphi 0, %s103
      %s107 = sphi 0, %s106
      %s123 = sphi 0, %s107
      %s127 = sphi 0, %s127
      %s129 = sphi 0, %s127
      %s130 = sphi 0, %s129
      %s144 = sphi 0, %s130
      %s148 = sphi 0, %s148
      %s150 = sphi 0, %s148
      %s151 = sphi 0, %s150
      %s165 = sphi 0, %s151
      %s169 = sphi 0, %s169
      %s171 = sphi 0, %s169
      %s172 = sphi 0, %s171
      %s186 = sphi 0, %s172
      %s190 = sphi 0, %s190
      %s192 = sphi 0, %s190
      %s193 = sphi 0, %s192
      %s207 = sphi 0, %s193
      %s211 = sphi 0, %s211
      %s213 = sphi 0, %s211
      %s214 = sphi 0, %s213
      %s228 = sphi 0, %s214
      %s232 = sphi 0, %s232
      %s234 = sphi 0, %s232
      %s235 = sphi 0, %s234
      %s249 = sphi 0, %s235
      %s253 = sphi 0, %s253
      %s255 = sphi 0, %s253
      %s256 = sphi 0, %s255
      %s270 = sphi 0, %s256
      %s278 = sphi 0, %s280
      %s281 = sphi 0, %s278
      %s282 = sphi 0, %s281
      %s298 = sphi 0, %s282
    $region4: #{more_atten_forward.3} parent=1 // loop_header_branch
      %30 = sbr.rel (%p28) target = $region8
    $region5: #{more_atten_forward.3} parent=1 // loop_body
      %s32 = ssub.s32 %s27, 1
      %s33 = ssub.s32 %s27, 2
      %s40 = sadd.s32 1, %s35
      %p41 = scmp.ge.s32.totalorder %s40, 7
      %s42 = scalar_select %p41, 0, %s40
      %s43 = sadd.s32 1, %s34
      %s44 = scalar_select %p41, %s43, %s34
      %p45 = scmp.ge.s32.totalorder %s44, 1
      %s46 = scalar_select %p45, 0, %s44
      %s47 = ssub.s32 %s35, %s42
      %s48 = ssub.s32 %s34, %s46
      %s49 = sor.u32 %s47, %s48
      %p50 = scmp.eq.s32.totalorder %s49, 0
      %s52 = sadd.s32 %s51, 1
      %s53 = scalar_select %p50, %s51, %s52
      %p56 = pneg %p50
      %p57 = scmp.eq.s32.totalorder %s27, 6
      %p58 = por %p56, %p57
      %p59 = scmp.ne.s32.totalorder %s51, %s54
      %p60 = scmp.eq.s32.totalorder %s27, 0
      %p61 = por %p59, %p60
      %p62 = scmp.ne.s32.totalorder %s51, %s54
      %p63 = scmp.eq.s32.totalorder %s32, 6
      %p64 = por %p62, %p63
      %p65 = scmp.ne.s32.totalorder %s54, %s55
      %p66 = scmp.eq.s32.totalorder %s32, 0
      %p67 = por %p65, %p66
      %p68 = scmp.ne.s32.totalorder %s54, %s55
      %p69 = scmp.eq.s32.totalorder %s33, 6
      %p70 = por %p68, %p69
      %p72 = scmp.ne.s32.totalorder %s55, %s71
      %p73 = scmp.eq.s32.totalorder %s33, 0
      %p74 = por %p72, %p73
      %s75 = ssub.s32 %s34, %s46
      %p76 = scmp.eq.s32.totalorder %s75, 0
      %s78 = sadd.s32 %s77, 1
      %s79 = scalar_select %p76, %s77, %s78
      %p82 = pneg %p76
      %p83 = scmp.eq.s32.totalorder %s27, 6
      %p84 = por %p82, %p83
      %p85 = scmp.ne.s32.totalorder %s77, %s80
      %p86 = scmp.eq.s32.totalorder %s27, 0
      %p87 = por %p85, %p86
      %p88 = scmp.ne.s32.totalorder %s77, %s80
      %p89 = scmp.eq.s32.totalorder %s32, 6
      %p90 = por %p88, %p89
      %p91 = scmp.ne.s32.totalorder %s80, %s81
      %p92 = scmp.eq.s32.totalorder %s32, 0
      %p93 = por %p91, %p92
      %p94 = scmp.ne.s32.totalorder %s80, %s81
      %p95 = scmp.eq.s32.totalorder %s33, 6
      %p96 = por %p94, %p95
      %p98 = scmp.ne.s32.totalorder %s81, %s97
      %p99 = scmp.eq.s32.totalorder %s33, 0
      %p100 = por %p98, %p99
      %s101 = ssub.s32 %s34, %s46
      %p102 = scmp.eq.s32.totalorder %s101, 0
      %s104 = sadd.s32 %s103, 1
      %s105 = scalar_select %p102, %s103, %s104
      %p108 = pneg %p102
      %p109 = scmp.eq.s32.totalorder %s27, 6
      %p110 = por %p108, %p109
      %p111 = scmp.ne.s32.totalorder %s103, %s106
      %p112 = scmp.eq.s32.totalorder %s27, 0
      %p113 = por %p111, %p112
      %p114 = scmp.ne.s32.totalorder %s103, %s106
      %p115 = scmp.eq.s32.totalorder %s32, 6
      %p116 = por %p114, %p115
      %p117 = scmp.ne.s32.totalorder %s106, %s107
      %p118 = scmp.eq.s32.totalorder %s32, 0
      %p119 = por %p117, %p118
      %p120 = scmp.ne.s32.totalorder %s106, %s107
      %p121 = scmp.eq.s32.totalorder %s33, 6
      %p122 = por %p120, %p121
      %p124 = scmp.ne.s32.totalorder %s107, %s123
      %p125 = scmp.eq.s32.totalorder %s33, 0
      %p126 = por %p124, %p125
      %s128 = sadd.s32 %s127, 1
      %p131 = scmp.eq.s32.totalorder %s27, 6
      %p132 = scmp.ne.s32.totalorder %s127, %s129
      %p133 = scmp.eq.s32.totalorder %s27, 0
      %p134 = por %p132, %p133
      %p135 = scmp.ne.s32.totalorder %s127, %s129
      %p136 = scmp.eq.s32.totalorder %s32, 6
      %p137 = por %p135, %p136
      %p138 = scmp.ne.s32.totalorder %s129, %s130
      %p139 = scmp.eq.s32.totalorder %s32, 0
      %p140 = por %p138, %p139
      %p141 = scmp.ne.s32.totalorder %s129, %s130
      %p142 = scmp.eq.s32.totalorder %s33, 6
      %p143 = por %p141, %p142
      %p145 = scmp.ne.s32.totalorder %s130, %s144
      %p146 = scmp.eq.s32.totalorder %s33, 0
      %p147 = por %p145, %p146
      %s149 = sadd.s32 %s148, 1
      %p152 = scmp.eq.s32.totalorder %s27, 6
      %p153 = scmp.ne.s32.totalorder %s148, %s150
      %p154 = scmp.eq.s32.totalorder %s27, 0
      %p155 = por %p153, %p154
      %p156 = scmp.ne.s32.totalorder %s148, %s150
      %p157 = scmp.eq.s32.totalorder %s32, 6
      %p158 = por %p156, %p157
      %p159 = scmp.ne.s32.totalorder %s150, %s151
      %p160 = scmp.eq.s32.totalorder %s32, 0
      %p161 = por %p159, %p160
      %p162 = scmp.ne.s32.totalorder %s150, %s151
      %p163 = scmp.eq.s32.totalorder %s33, 6
      %p164 = por %p162, %p163
      %p166 = scmp.ne.s32.totalorder %s151, %s165
      %p167 = scmp.eq.s32.totalorder %s33, 0
      %p168 = por %p166, %p167
      %s170 = sadd.s32 %s169, 1
      %p173 = scmp.eq.s32.totalorder %s27, 6
      %p174 = scmp.ne.s32.totalorder %s169, %s171
      %p175 = scmp.eq.s32.totalorder %s27, 0
      %p176 = por %p174, %p175
      %p177 = scmp.ne.s32.totalorder %s169, %s171
      %p178 = scmp.eq.s32.totalorder %s32, 6
      %p179 = por %p177, %p178
      %p180 = scmp.ne.s32.totalorder %s171, %s172
      %p181 = scmp.eq.s32.totalorder %s32, 0
      %p182 = por %p180, %p181
      %p183 = scmp.ne.s32.totalorder %s171, %s172
      %p184 = scmp.eq.s32.totalorder %s33, 6
      %p185 = por %p183, %p184
      %p187 = scmp.ne.s32.totalorder %s172, %s186
      %p188 = scmp.eq.s32.totalorder %s33, 0
      %p189 = por %p187, %p188
      %s191 = sadd.s32 %s190, 1
      %p194 = scmp.eq.s32.totalorder %s27, 6
      %p195 = scmp.ne.s32.totalorder %s190, %s192
      %p196 = scmp.eq.s32.totalorder %s27, 0
      %p197 = por %p195, %p196
      %p198 = scmp.ne.s32.totalorder %s190, %s192
      %p199 = scmp.eq.s32.totalorder %s32, 6
      %p200 = por %p198, %p199
      %p201 = scmp.ne.s32.totalorder %s192, %s193
      %p202 = scmp.eq.s32.totalorder %s32, 0
      %p203 = por %p201, %p202
      %p204 = scmp.ne.s32.totalorder %s192, %s193
      %p205 = scmp.eq.s32.totalorder %s33, 6
      %p206 = por %p204, %p205
      %p208 = scmp.ne.s32.totalorder %s193, %s207
      %p209 = scmp.eq.s32.totalorder %s33, 0
      %p210 = por %p208, %p209
      %s212 = sadd.s32 %s211, 1
      %p215 = scmp.eq.s32.totalorder %s27, 6
      %p216 = scmp.ne.s32.totalorder %s211, %s213
      %p217 = scmp.eq.s32.totalorder %s27, 0
      %p218 = por %p216, %p217
      %p219 = scmp.ne.s32.totalorder %s211, %s213
      %p220 = scmp.eq.s32.totalorder %s32, 6
      %p221 = por %p219, %p220
      %p222 = scmp.ne.s32.totalorder %s213, %s214
      %p223 = scmp.eq.s32.totalorder %s32, 0
      %p224 = por %p222, %p223
      %p225 = scmp.ne.s32.totalorder %s213, %s214
      %p226 = scmp.eq.s32.totalorder %s33, 6
      %p227 = por %p225, %p226
      %p229 = scmp.ne.s32.totalorder %s214, %s228
      %p230 = scmp.eq.s32.totalorder %s33, 0
      %p231 = por %p229, %p230
      %s233 = sadd.s32 %s232, 1
      %p236 = scmp.eq.s32.totalorder %s27, 6
      %p237 = scmp.ne.s32.totalorder %s232, %s234
      %p238 = scmp.eq.s32.totalorder %s27, 0
      %p239 = por %p237, %p238
      %p240 = scmp.ne.s32.totalorder %s232, %s234
      %p241 = scmp.eq.s32.totalorder %s32, 6
      %p242 = por %p240, %p241
      %p243 = scmp.ne.s32.totalorder %s234, %s235
      %p244 = scmp.eq.s32.totalorder %s32, 0
      %p245 = por %p243, %p244
      %p246 = scmp.ne.s32.totalorder %s234, %s235
      %p247 = scmp.eq.s32.totalorder %s33, 6
      %p248 = por %p246, %p247
      %p250 = scmp.ne.s32.totalorder %s235, %s249
      %p251 = scmp.eq.s32.totalorder %s33, 0
      %p252 = por %p250, %p251
      %s254 = sadd.s32 %s253, 1
      %p257 = scmp.eq.s32.totalorder %s27, 6
      %p258 = scmp.ne.s32.totalorder %s253, %s255
      %p259 = scmp.eq.s32.totalorder %s27, 0
      %p260 = por %p258, %p259
      %p261 = scmp.ne.s32.totalorder %s253, %s255
      %p262 = scmp.eq.s32.totalorder %s32, 6
      %p263 = por %p261, %p262
      %p264 = scmp.ne.s32.totalorder %s255, %s256
      %p265 = scmp.eq.s32.totalorder %s32, 0
      %p266 = por %p264, %p265
      %p267 = scmp.ne.s32.totalorder %s255, %s256
      %p268 = scmp.eq.s32.totalorder %s33, 6
      %p269 = por %p267, %p268
      %p271 = scmp.ne.s32.totalorder %s256, %s270
      %p272 = scmp.eq.s32.totalorder %s33, 0
      %p273 = por %p271, %p272
      %s274 = ssub.s32 %s35, %s42
      %s275 = ssub.s32 %s34, %s46
      %s276 = sor.u32 %s274, %s275
      %p277 = scmp.eq.s32.totalorder %s276, 0
      %s279 = sadd.s32 %s278, 1
      %s280 = scalar_select %p277, %s278, %s279
      %p283 = pneg %p277
      %p284 = scmp.eq.s32.totalorder %s27, 6
      %p285 = por %p283, %p284
      %p286 = scmp.ne.s32.totalorder %s278, %s281
      %p287 = scmp.eq.s32.totalorder %s27, 0
      %p288 = por %p286, %p287
      %p289 = scmp.ne.s32.totalorder %s278, %s281
      %p290 = scmp.eq.s32.totalorder %s32, 6
      %p291 = por %p289, %p290
      %p292 = scmp.ne.s32.totalorder %s281, %s282
      %p293 = scmp.eq.s32.totalorder %s32, 0
      %p294 = por %p292, %p293
      %p295 = scmp.ne.s32.totalorder %s281, %s282
      %p296 = scmp.eq.s32.totalorder %s33, 6
      %p297 = por %p295, %p296
      %p299 = scmp.ne.s32.totalorder %s282, %s298
      %p300 = scmp.eq.s32.totalorder %s33, 0
      %p301 = por %p299, %p300
      %p302 = scmp.le.s32.totalorder 1, %s27
      %p303 = scmp.lt.s32.totalorder %s27, 8
      %p304 = pnand %p302, %p303
      %p305 = pneg %p304
      // Predicated region
      $region9: #{more_atten_forward.3} parent=5 // pred_check
        _
      $region10: #{more_atten_forward.3} parent=5 // pred_check_branch
        %307 = sbr.rel (%p304) target = $region12
      $region11: #{more_atten_forward.3} parent=5 // pred_region
        %s308 = ssub.s32 %s27, 1
        // Predicated region
        $region13: #{more_atten_forward.3} parent=11 // pred_check
          %p309 = pneg %p93
        $region14: #{more_atten_forward.3} parent=11 // pred_check_branch
          %311 = sbr.rel (%p309) target = $region16
        $region15: #{more_atten_forward.3} parent=11 // pred_region
          %s312 = smul.u32 8, %s36
          %s314 = ssub.s32 1024, 1024
          %315 = vsyncadd [#allocation8], %s314
          %s316 = smul.addr %s312, 128
          %s317 = scalar_lea.hbm %s1, %s316
          %s318 = sshll.u32 [#allocation7], 4
          %s319 = int_to_ptr.vmem [resolvable:$true] %s318
          %324 = dma.hbm_to_vmem [thread:$0]  %s317, 1024, %s319, [#allocation8], 128, 128, 8
        $region16: #{more_atten_forward.3} parent=11 // pred_fallthru
          _
        // Predicated region
        $region17: #{more_atten_forward.3} parent=11 // pred_check
          %p325 = pneg %p119
        $region18: #{more_atten_forward.3} parent=11 // pred_check_branch
          %327 = sbr.rel (%p325) target = $region20
        $region19: #{more_atten_forward.3} parent=11 // pred_region
          %s328 = smul.u32 8, %s36
          %s330 = ssub.s32 1024, 1024
          %331 = vsyncadd [#allocation8], %s330
          %s332 = smul.addr %s328, 128
          %s333 = scalar_lea.hbm %s2, %s332
          %s334 = sshll.u32 [#allocation9], 4
          %s335 = int_to_ptr.vmem [resolvable:$true] %s334
          %340 = dma.hbm_to_vmem [thread:$0]  %s333, 1024, %s335, [#allocation8], 128, 128, 8
        $region20: #{more_atten_forward.3} parent=11 // pred_fallthru
          _
        // Predicated region
        $region21: #{more_atten_forward.3} parent=11 // pred_check
          %p341 = pneg %p140
        $region22: #{more_atten_forward.3} parent=11 // pred_check_branch
          %343 = sbr.rel (%p341) target = $region24
        $region23: #{more_atten_forward.3} parent=11 // pred_region
          %s345 = ssub.s32 2048, 2048
          %346 = vsyncadd [#allocation11], %s345
          %s347 = sshll.u32 [#allocation10], 4
          %s348 = int_to_ptr.vmem [resolvable:$true] %s347
          %353 = dma.hbm_to_vmem [thread:$0]  %s3, 2048, %s348, [#allocation11], 128, 128, 8
        $region24: #{more_atten_forward.3} parent=11 // pred_fallthru
          _
        // Predicated region
        $region25: #{more_atten_forward.3} parent=11 // pred_check
          %p354 = pneg %p161
        $region26: #{more_atten_forward.3} parent=11 // pred_check_branch
          %356 = sbr.rel (%p354) target = $region28
        $region27: #{more_atten_forward.3} parent=11 // pred_region
          %s358 = ssub.s32 2048, 2048
          %359 = vsyncadd [#allocation11], %s358
          %s360 = sshll.u32 [#allocation12], 4
          %s361 = int_to_ptr.vmem [resolvable:$true] %s360
          %366 = dma.hbm_to_vmem [thread:$0]  %s4, 2048, %s361, [#allocation11], 128, 128, 8
        $region28: #{more_atten_forward.3} parent=11 // pred_fallthru
          _
        // Predicated region
        $region29: #{more_atten_forward.3} parent=11 // pred_check
          %p367 = pneg %p182
        $region30: #{more_atten_forward.3} parent=11 // pred_check_branch
          %369 = sbr.rel (%p367) target = $region32
        $region31: #{more_atten_forward.3} parent=11 // pred_region
          %s371 = ssub.s32 16, 16
          %372 = vsyncadd [#allocation14], %s371
          %s374 = sshll.u32 [#allocation13], 4
          %s375 = int_to_ptr.vmem [resolvable:$true] %s374
          %377 = dma.hbm_to_vmem [thread:$0]  %s5, 16, %s375, [#allocation14]
        $region32: #{more_atten_forward.3} parent=11 // pred_fallthru
          _
        // Predicated region
        $region33: #{more_atten_forward.3} parent=11 // pred_check
          %p378 = pneg %p203
        $region34: #{more_atten_forward.3} parent=11 // pred_check_branch
          %380 = sbr.rel (%p378) target = $region36
        $region35: #{more_atten_forward.3} parent=11 // pred_region
          %s382 = ssub.s32 24576, 24576
          %383 = vsyncadd [#allocation14], %s382
          %s384 = sshll.u32 [#allocation15], 4
          %s385 = int_to_ptr.vmem [resolvable:$true] %s384
          %390 = dma.hbm_to_vmem [thread:$0]  %s6, 24576, %s385, [#allocation14], 512, 512, 32
        $region36: #{more_atten_forward.3} parent=11 // pred_fallthru
          _
        // Predicated region
        $region37: #{more_atten_forward.3} parent=11 // pred_check
          %p391 = pneg %p224
        $region38: #{more_atten_forward.3} parent=11 // pred_check_branch
          %393 = sbr.rel (%p391) target = $region40
        $region39: #{more_atten_forward.3} parent=11 // pred_region
          %s395 = ssub.s32 64, 64
          %396 = vsyncadd [#allocation17], %s395
          %s398 = sshll.u32 [#allocation16], 4
          %s399 = int_to_ptr.vmem [resolvable:$true] %s398
          %401 = dma.hbm_to_vmem [thread:$0]  %s7, 64, %s399, [#allocation17]
        $region40: #{more_atten_forward.3} parent=11 // pred_fallthru
          _
        // Predicated region
        $region41: #{more_atten_forward.3} parent=11 // pred_check
          %p402 = pneg %p245
        $region42: #{more_atten_forward.3} parent=11 // pred_check_branch
          %404 = sbr.rel (%p402) target = $region44
        $region43: #{more_atten_forward.3} parent=11 // pred_region
          %s406 = ssub.s32 2048, 2048
          %407 = vsyncadd [#allocation17], %s406
          %s408 = sshll.u32 [#allocation18], 4
          %s409 = int_to_ptr.vmem [resolvable:$true] %s408
          %414 = dma.hbm_to_vmem [thread:$0]  %s8, 2048, %s409, [#allocation17], 128, 128, 8
        $region44: #{more_atten_forward.3} parent=11 // pred_fallthru
          _
        // Predicated region
        $region45: #{more_atten_forward.3} parent=11 // pred_check
          %p415 = pneg %p266
        $region46: #{more_atten_forward.3} parent=11 // pred_check_branch
          %417 = sbr.rel (%p415) target = $region48
        $region47: #{more_atten_forward.3} parent=11 // pred_region
          %s419 = ssub.s32 16, 16
          %420 = vsyncadd [#allocation20], %s419
          %s422 = sshll.u32 [#allocation19], 4
          %s423 = int_to_ptr.vmem [resolvable:$true] %s422
          %425 = dma.hbm_to_vmem [thread:$0]  %s9, 16, %s423, [#allocation20]
        $region48: #{more_atten_forward.3} parent=11 // pred_fallthru
          _
      $region12: #{more_atten_forward.3} parent=5 // pred_fallthru
        _
      %p426 = scmp.lt.s32.totalorder %s27, 7
      // Predicated region
      $region49: #{more_atten_forward.3} parent=5 // pred_check
        %p427 = pneg %p426
      $region50: #{more_atten_forward.3} parent=5 // pred_check_branch
        %429 = sbr.rel (%p427) target = $region52
      $region51: #{more_atten_forward.3} parent=5 // pred_region
        // Predicated region
        $region53: #{more_atten_forward.3} parent=51 // pred_check
          %p430 = pneg %p61
        $region54: #{more_atten_forward.3} parent=51 // pred_check_branch
          %432 = sbr.rel (%p430) target = $region56
        $region55: #{more_atten_forward.3} parent=51 // pred_region
          %s433 = sand.u32 %s51, 1
          %s434 = scalar_lea.sflag [#allocation5], %s433
          %s435 = sand.u32 %s51, 1
          %s436 = smul.addr %s435, 8
          %s437 = scalar_lea.vmem [#allocation4], %s436
          %s439 = ssub.s32 128, 128
          %440 = vsyncadd %s434, %s439
          %s441 = sadd.s32 %s34, %s35
          %s442 = smul.addr %s441, 128
          %s443 = scalar_lea.hbm %s0, %s442
          %s445 = sshll.u32 %s437, 4
          %s446 = int_to_ptr.vmem [resolvable:$true] %s445
          %448 = dma.hbm_to_vmem [thread:$0]  %s443, 128, %s446, %s434
        $region56: #{more_atten_forward.3} parent=51 // pred_fallthru
          _
      $region52: #{more_atten_forward.3} parent=5 // pred_fallthru
        _
      %p449 = scmp.le.s32.totalorder 1, %s27
      %p450 = scmp.lt.s32.totalorder %s27, 8
      %p451 = pnand %p449, %p450
      %p452 = pneg %p451
      // Predicated region
      $region57: #{more_atten_forward.3} parent=5 // pred_check
        _
      $region58: #{more_atten_forward.3} parent=5 // pred_check_branch
        %454 = sbr.rel (%p451) target = $region60
      $region59: #{more_atten_forward.3} parent=5 // pred_region
        %s455 = ssub.s32 %s27, 1
        %s456 = sand.u32 %s54, 1
        %s457 = scalar_lea.sflag [#allocation5], %s456
        %s458 = sand.u32 %s54, 1
        %s459 = smul.addr %s458, 8
        %s460 = scalar_lea.vmem [#allocation4], %s459
        // Predicated region
        $region61: #{more_atten_forward.3} parent=59 // pred_check
          %p461 = pneg %p67
        $region62: #{more_atten_forward.3} parent=59 // pred_check_branch
          %463 = sbr.rel (%p461) target = $region64
        $region63: #{more_atten_forward.3} parent=59 // pred_region
          %464 = dma.done %s457, 128
        $region64: #{more_atten_forward.3} parent=59 // pred_fallthru
          _
        // Predicated region
        $region65: #{more_atten_forward.3} parent=59 // pred_check
          %p465 = pneg %p93
        $region66: #{more_atten_forward.3} parent=59 // pred_check_branch
          %467 = sbr.rel (%p465) target = $region68
        $region67: #{more_atten_forward.3} parent=59 // pred_region
          %468 = dma.done [#allocation8], 1024
        $region68: #{more_atten_forward.3} parent=59 // pred_fallthru
          _
        // Predicated region
        $region69: #{more_atten_forward.3} parent=59 // pred_check
          %p469 = pneg %p119
        $region70: #{more_atten_forward.3} parent=59 // pred_check_branch
          %471 = sbr.rel (%p469) target = $region72
        $region71: #{more_atten_forward.3} parent=59 // pred_region
          %472 = dma.done [#allocation8], 1024
        $region72: #{more_atten_forward.3} parent=59 // pred_fallthru
          _
        // Predicated region
        $region73: #{more_atten_forward.3} parent=59 // pred_check
          %p473 = pneg %p140
        $region74: #{more_atten_forward.3} parent=59 // pred_check_branch
          %475 = sbr.rel (%p473) target = $region76
        $region75: #{more_atten_forward.3} parent=59 // pred_region
          %476 = dma.done [#allocation11], 2048
        $region76: #{more_atten_forward.3} parent=59 // pred_fallthru
          _
        // Predicated region
        $region77: #{more_atten_forward.3} parent=59 // pred_check
          %p477 = pneg %p161
        $region78: #{more_atten_forward.3} parent=59 // pred_check_branch
          %479 = sbr.rel (%p477) target = $region80
        $region79: #{more_atten_forward.3} parent=59 // pred_region
          %480 = dma.done [#allocation11], 2048
        $region80: #{more_atten_forward.3} parent=59 // pred_fallthru
          _
        // Predicated region
        $region81: #{more_atten_forward.3} parent=59 // pred_check
          %p481 = pneg %p182
        $region82: #{more_atten_forward.3} parent=59 // pred_check_branch
          %483 = sbr.rel (%p481) target = $region84
        $region83: #{more_atten_forward.3} parent=59 // pred_region
          %484 = dma.done [#allocation14], 16
        $region84: #{more_atten_forward.3} parent=59 // pred_fallthru
          _
        // Predicated region
        $region85: #{more_atten_forward.3} parent=59 // pred_check
          %p485 = pneg %p203
        $region86: #{more_atten_forward.3} parent=59 // pred_check_branch
          %487 = sbr.rel (%p485) target = $region88
        $region87: #{more_atten_forward.3} parent=59 // pred_region
          %488 = dma.done [#allocation14], 24576
        $region88: #{more_atten_forward.3} parent=59 // pred_fallthru
          _
        // Predicated region
        $region89: #{more_atten_forward.3} parent=59 // pred_check
          %p489 = pneg %p224
        $region90: #{more_atten_forward.3} parent=59 // pred_check_branch
          %491 = sbr.rel (%p489) target = $region92
        $region91: #{more_atten_forward.3} parent=59 // pred_region
          %492 = dma.done [#allocation17], 64
        $region92: #{more_atten_forward.3} parent=59 // pred_fallthru
          _
        // Predicated region
        $region93: #{more_atten_forward.3} parent=59 // pred_check
          %p493 = pneg %p245
        $region94: #{more_atten_forward.3} parent=59 // pred_check_branch
          %495 = sbr.rel (%p493) target = $region96
        $region95: #{more_atten_forward.3} parent=59 // pred_region
          %496 = dma.done [#allocation17], 2048
        $region96: #{more_atten_forward.3} parent=59 // pred_fallthru
          _
        // Predicated region
        $region97: #{more_atten_forward.3} parent=59 // pred_check
          %p497 = pneg %p266
        $region98: #{more_atten_forward.3} parent=59 // pred_check_branch
          %499 = sbr.rel (%p497) target = $region100
        $region99: #{more_atten_forward.3} parent=59 // pred_region
          %500 = dma.done [#allocation20], 16
        $region100: #{more_atten_forward.3} parent=59 // pred_fallthru
          _
        %s501 = sand.u32 %s54, 1
        %s502 = scalar_lea.sflag [#allocation5], %s501
        %s503 = sand.u32 %s54, 1
        %s504 = smul.addr %s503, 8
        %s505 = scalar_lea.vmem [#allocation4], %s504
        %p506 = pneg %p67
        %p507 = pneg %p64
        %p508 = pneg %p93
        %p509 = pneg %p90
        %p510 = pneg %p119
        %p511 = pneg %p116
        %p512 = pneg %p140
        %p513 = pneg %p137
        %p514 = pneg %p161
        %p515 = pneg %p158
        %p516 = pneg %p182
        %p517 = pneg %p179
        %p518 = pneg %p203
        %p519 = pneg %p200
        %p520 = pneg %p224
        %p521 = pneg %p221
        %p522 = pneg %p245
        %p523 = pneg %p242
        %p524 = pneg %p266
        %p525 = pneg %p263
        %p526 = pneg %p294
        %p527 = pneg %p291
        %s528 = sand.u32 %s281, 1
        %s529 = scalar_lea.sflag [#allocation6], %s528
        %s530 = sand.u32 %s281, 1
        %s531 = smul.addr %s530, 8
        %s532 = scalar_lea.vmem [#allocation21], %s531
        %s533 = smul.u32 8, %s36
        %s534 = smul.u32 8, %s36
        %p535 = scmp.eq.s32.totalorder %s37, 0
        // Predicated region
        $region101: #{more_atten_forward.3} parent=59 // pred_check
          %p536 = pneg %p535
        $region102: #{more_atten_forward.3} parent=59 // pred_check_branch
          %538 = sbr.rel (%p536) target = $region104
        $region103: #{more_atten_forward.3} parent=59 // pred_region
          %539 = vst [vmem:[#allocation2] sm:$0xff] 0.0
          %540 = vst [vmem:[#allocation3] sm:$0xff] 0.0
        $region104: #{more_atten_forward.3} parent=59 // pred_fallthru
          _
        %v541 = vld [vmem:[%s460] sm:$0xff]
        %v542 = vld [vmem:[#allocation2] sm:$0xff]
        %v543 = vld [vmem:[#allocation3] sm:$0xff]
        %v544 = vld [vmem:[#allocation9] sm:$0xff]
        %v545 = vld [vmem:[#allocation9 + $0x8] sm:$0xff]
        %v546 = vld [vmem:[#allocation9 + $0x10] sm:$0xff]
        %v547 = vld [vmem:[#allocation9 + $0x18] sm:$0xff]
        %v548 = vld [vmem:[#allocation9 + $0x20] sm:$0xff]
        %v549 = vld [vmem:[#allocation9 + $0x28] sm:$0xff]
        %v550 = vld [vmem:[#allocation9 + $0x30] sm:$0xff]
        %v551 = vld [vmem:[#allocation9 + $0x38] sm:$0xff]
        %v552 = vld [vmem:[#allocation7] sm:$0xff]
        %v553 = vld [vmem:[#allocation7 + $0x8] sm:$0xff]
        %v554 = vld [vmem:[#allocation7 + $0x10] sm:$0xff]
        %v555 = vld [vmem:[#allocation7 + $0x18] sm:$0xff]
        %v556 = vld [vmem:[#allocation7 + $0x20] sm:$0xff]
        %v557 = vld [vmem:[#allocation7 + $0x28] sm:$0xff]
        %v558 = vld [vmem:[#allocation7 + $0x30] sm:$0xff]
        %v559 = vld [vmem:[#allocation7 + $0x38] sm:$0xff]
        %v560 = vld [vmem:[#allocation10] sm:$0xff]
        %v561 = vld [vmem:[#allocation10 + $0x8] sm:$0xff]
        %v562 = vld [vmem:[#allocation10 + $0x10] sm:$0xff]
        %v563 = vld [vmem:[#allocation10 + $0x18] sm:$0xff]
        %v564 = vld [vmem:[#allocation10 + $0x20] sm:$0xff]
        %v565 = vld [vmem:[#allocation10 + $0x28] sm:$0xff]
        %v566 = vld [vmem:[#allocation10 + $0x30] sm:$0xff]
        %v567 = vld [vmem:[#allocation10 + $0x38] sm:$0xff]
        %v568 = vld [vmem:[#allocation10 + $0x40] sm:$0xff]
        %v569 = vld [vmem:[#allocation10 + $0x48] sm:$0xff]
        %v570 = vld [vmem:[#allocation10 + $0x50] sm:$0xff]
        %v571 = vld [vmem:[#allocation10 + $0x58] sm:$0xff]
        %v572 = vld [vmem:[#allocation10 + $0x60] sm:$0xff]
        %v573 = vld [vmem:[#allocation10 + $0x68] sm:$0xff]
        %v574 = vld [vmem:[#allocation10 + $0x70] sm:$0xff]
        %v575 = vld [vmem:[#allocation10 + $0x78] sm:$0xff]
        %576 = vmatprep.subr.mxu0 0.0
        %577 = vmatpush1.msra.mxu0 %v560
        %578 = vmatprep.subr.mxu0 0.0
        %579 = vmatpush1.msra.mxu0 %v561
        %580 = vmatprep.subr.mxu0 0.0
        %581 = vmatpush1.msra.mxu0 %v562
        %582 = vmatprep.subr.mxu0 0.0
        %583 = vmatpush1.msra.mxu0 %v563
        %584 = vmatprep.subr.mxu0 0.0
        %585 = vmatpush1.msra.mxu0 %v564
        %586 = vmatprep.subr.mxu0 0.0
        %587 = vmatpush1.msra.mxu0 %v565
        %588 = vmatprep.subr.mxu0 0.0
        %589 = vmatpush1.msra.mxu0 %v566
        %590 = vmatprep.subr.mxu0 0.0
        %591 = vmatpush1.msra.mxu0 %v567
        %592 = vmatprep.subr.mxu0 0.0
        %593 = vmatpush1.msra.mxu0 %v568
        %594 = vmatprep.subr.mxu0 0.0
        %595 = vmatpush1.msra.mxu0 %v569
        %596 = vmatprep.subr.mxu0 0.0
        %597 = vmatpush1.msra.mxu0 %v570
        %598 = vmatprep.subr.mxu0 0.0
        %599 = vmatpush1.msra.mxu0 %v571
        %600 = vmatprep.subr.mxu0 0.0
        %601 = vmatpush1.msra.mxu0 %v572
        %602 = vmatprep.subr.mxu0 0.0
        %603 = vmatpush1.msra.mxu0 %v573
        %604 = vmatprep.subr.mxu0 0.0
        %605 = vmatpush1.msra.mxu0 %v574
        %606 = vmatprep.subr.mxu0 0.0
        %607 = vmatpush1.msra.mxu0 %v575
        %608 = vmatprep.subr.mxu0 0.0
        %609 = vmatpush1.msra.mxu0 0.0
        %610 = vmatprep.subr.mxu0 0.0
        %611 = vmatpush1.msra.mxu0 0.0
        %612 = vmatprep.subr.mxu0 0.0
        %613 = vmatpush1.msra.mxu0 0.0
        %614 = vmatprep.subr.mxu0 0.0
        %615 = vmatpush1.msra.mxu0 0.0
        %616 = vmatprep.subr.mxu0 0.0
        %617 = vmatpush1.msra.mxu0 0.0
        %618 = vmatprep.subr.mxu0 0.0
        %619 = vmatpush1.msra.mxu0 0.0
        %620 = vmatprep.subr.mxu0 0.0
        %621 = vmatpush1.msra.mxu0 0.0
        %622 = vmatprep.subr.mxu0 0.0
        %623 = vmatpush1.msra.mxu0 0.0
        %624 = vmatprep.subr.mxu0 0.0
        %625 = vmatpush1.msra.mxu0 0.0
        %626 = vmatprep.subr.mxu0 0.0
        %627 = vmatpush1.msra.mxu0 0.0
        %628 = vmatprep.subr.mxu0 0.0
        %629 = vmatpush1.msra.mxu0 0.0
        %630 = vmatprep.subr.mxu0 0.0
        %631 = vmatpush1.msra.mxu0 0.0
        %632 = vmatprep.subr.mxu0 0.0
        %633 = vmatpush1.msra.mxu0 0.0
        %634 = vmatprep.subr.mxu0 0.0
        %635 = vmatpush1.msra.mxu0 0.0
        %636 = vmatprep.subr.mxu0 0.0
        %637 = vmatpush1.msra.mxu0 0.0
        %638 = vmatprep.subr.mxu0 0.0
        %639 = vmatpush1.msra.mxu0 0.0
        %640 = vmatprep.mubr.f32.mxu0 0.0
        %641 = vmatmul.mubr.f32.gmra.mrb[0].mxu0 %v552
        %v642 = vpop.f32.mrb[0].mxu0
        %v643 = vadd.f32 0.0, %v642
        %v644 = vpop.f32.mrb[0].mxu0
        %645 = vmatprep.mubr.f32.mxu0 0.0
        %646 = vmatmul.mubr.f32.gmra.mrb[0].mxu0 %v553
        %v647 = vpop.f32.mrb[0].mxu0
        %v648 = vadd.f32 0.0, %v647
        %v649 = vpop.f32.mrb[0].mxu0
        %650 = vmatprep.mubr.f32.mxu0 0.0
        %651 = vmatmul.mubr.f32.gmra.mrb[0].mxu0 %v554
        %v652 = vpop.f32.mrb[0].mxu0
        %v653 = vadd.f32 0.0, %v652
        %v654 = vpop.f32.mrb[0].mxu0
        %655 = vmatprep.mubr.f32.mxu0 0.0
        %656 = vmatmul.mubr.f32.gmra.mrb[0].mxu0 %v555
        %v657 = vpop.f32.mrb[0].mxu0
        %v658 = vadd.f32 0.0, %v657
        %v659 = vpop.f32.mrb[0].mxu0
        %660 = vmatprep.mubr.f32.mxu0 0.0
        %661 = vmatmul.mubr.f32.gmra.mrb[0].mxu0 %v556
        %v662 = vpop.f32.mrb[0].mxu0
        %v663 = vadd.f32 0.0, %v662
        %v664 = vpop.f32.mrb[0].mxu0
        %665 = vmatprep.mubr.f32.mxu0 0.0
        %666 = vmatmul.mubr.f32.gmra.mrb[0].mxu0 %v557
        %v667 = vpop.f32.mrb[0].mxu0
        %v668 = vadd.f32 0.0, %v667
        %v669 = vpop.f32.mrb[0].mxu0
        %670 = vmatprep.mubr.f32.mxu0 0.0
        %671 = vmatmul.mubr.f32.gmra.mrb[0].mxu0 %v558
        %v672 = vpop.f32.mrb[0].mxu0
        %v673 = vadd.f32 0.0, %v672
        %v674 = vpop.f32.mrb[0].mxu0
        %675 = vmatprep.mubr.f32.mxu0 0.0
        %676 = vmatmul.mubr.f32.gmra.mrb[0].mxu0 %v559
        %v677 = vpop.f32.mrb[0].mxu0
        %v678 = vadd.f32 0.0, %v677
        %v679 = vpop.f32.mrb[0].mxu0
        %680 = vdwg.mxu0
        %v681 = vld [vmem:[#allocation12] sm:$0xff]
        %v682 = vld [vmem:[#allocation12 + $0x8] sm:$0xff]
        %v683 = vld [vmem:[#allocation12 + $0x10] sm:$0xff]
        %v684 = vld [vmem:[#allocation12 + $0x18] sm:$0xff]
        %v685 = vld [vmem:[#allocation12 + $0x20] sm:$0xff]
        %v686 = vld [vmem:[#allocation12 + $0x28] sm:$0xff]
        %v687 = vld [vmem:[#allocation12 + $0x30] sm:$0xff]
        %v688 = vld [vmem:[#allocation12 + $0x38] sm:$0xff]
        %v689 = vld [vmem:[#allocation12 + $0x40] sm:$0xff]
        %v690 = vld [vmem:[#allocation12 + $0x48] sm:$0xff]
        %v691 = vld [vmem:[#allocation12 + $0x50] sm:$0xff]
        %v692 = vld [vmem:[#allocation12 + $0x58] sm:$0xff]
        %v693 = vld [vmem:[#allocation12 + $0x60] sm:$0xff]
        %v694 = vld [vmem:[#allocation12 + $0x68] sm:$0xff]
        %v695 = vld [vmem:[#allocation12 + $0x70] sm:$0xff]
        %v696 = vld [vmem:[#allocation12 + $0x78] sm:$0xff]
        %697 = vmatprep.subr.mxu0 0.0
        %698 = vmatpush1.msra.mxu0 %v681
        %699 = vmatprep.subr.mxu0 0.0
        %700 = vmatpush1.msra.mxu0 %v682
        %701 = vmatprep.subr.mxu0 0.0
        %702 = vmatpush1.msra.mxu0 %v683
        %703 = vmatprep.subr.mxu0 0.0
        %704 = vmatpush1.msra.mxu0 %v684
        %705 = vmatprep.subr.mxu0 0.0
        %706 = vmatpush1.msra.mxu0 %v685
        %707 = vmatprep.subr.mxu0 0.0
        %708 = vmatpush1.msra.mxu0 %v686
        %709 = vmatprep.subr.mxu0 0.0
        %710 = vmatpush1.msra.mxu0 %v687
        %711 = vmatprep.subr.mxu0 0.0
        %712 = vmatpush1.msra.mxu0 %v688
        %713 = vmatprep.subr.mxu0 0.0
        %714 = vmatpush1.msra.mxu0 %v689
        %715 = vmatprep.subr.mxu0 0.0
        %716 = vmatpush1.msra.mxu0 %v690
        %717 = vmatprep.subr.mxu0 0.0
        %718 = vmatpush1.msra.mxu0 %v691
        %719 = vmatprep.subr.mxu0 0.0
        %720 = vmatpush1.msra.mxu0 %v692
        %721 = vmatprep.subr.mxu0 0.0
        %722 = vmatpush1.msra.mxu0 %v693
        %723 = vmatprep.subr.mxu0 0.0
        %724 = vmatpush1.msra.mxu0 %v694
        %725 = vmatprep.subr.mxu0 0.0
        %726 = vmatpush1.msra.mxu0 %v695
        %727 = vmatprep.subr.mxu0 0.0
        %728 = vmatpush1.msra.mxu0 %v696
        %729 = vmatprep.subr.mxu0 0.0
        %730 = vmatpush1.msra.mxu0 0.0
        %731 = vmatprep.subr.mxu0 0.0
        %732 = vmatpush1.msra.mxu0 0.0
        %733 = vmatprep.subr.mxu0 0.0
        %734 = vmatpush1.msra.mxu0 0.0
        %735 = vmatprep.subr.mxu0 0.0
        %736 = vmatpush1.msra.mxu0 0.0
        %737 = vmatprep.subr.mxu0 0.0
        %738 = vmatpush1.msra.mxu0 0.0
        %739 = vmatprep.subr.mxu0 0.0
        %740 = vmatpush1.msra.mxu0 0.0
        %741 = vmatprep.subr.mxu0 0.0
        %742 = vmatpush1.msra.mxu0 0.0
        %743 = vmatprep.subr.mxu0 0.0
        %744 = vmatpush1.msra.mxu0 0.0
        %745 = vmatprep.subr.mxu0 0.0
        %746 = vmatpush1.msra.mxu0 0.0
        %747 = vmatprep.subr.mxu0 0.0
        %748 = vmatpush1.msra.mxu0 0.0
        %749 = vmatprep.subr.mxu0 0.0
        %750 = vmatpush1.msra.mxu0 0.0
        %751 = vmatprep.subr.mxu0 0.0
        %752 = vmatpush1.msra.mxu0 0.0
        %753 = vmatprep.subr.mxu0 0.0
        %754 = vmatpush1.msra.mxu0 0.0
        %755 = vmatprep.subr.mxu0 0.0
        %756 = vmatpush1.msra.mxu0 0.0
        %757 = vmatprep.subr.mxu0 0.0
        %758 = vmatpush1.msra.mxu0 0.0
        %759 = vmatprep.subr.mxu0 0.0
        %760 = vmatpush1.msra.mxu0 0.0
        %761 = vmatprep.mubr.f32.mxu0 0.0
        %762 = vmatmul.mubr.f32.gmra.mrb[0].mxu0 %v542
        %v763 = vpop.f32.mrb[0].mxu0
        %v764 = vadd.f32 0.0, %v763
        %v765 = vpop.f32.mrb[0].mxu0
        %766 = vdwg.mxu0
        %v768 = vcombine.high %v764, %v764
        %v770 = vunpack.c.l.s4 1966171168
        %v771 = vunpack.c.0.s8 %v770
        %v772 = vlaneseq
        %v773 = vshrl.u32 %v772, 7
        %v774 = vsub.s32 %v771, %v773
        %v775 = vrot.slane %v764, %v774
        %v777 = vunpack.c.l.s4 1966171168
        %v778 = vunpack.c.0.s8 %v777
        %v779 = vlaneseq
        %v780 = vshrl.u32 %v779, 7
        %v781 = vsub.s32 %v778, %v780
        %v782 = vrot.slane %v768, %v781
        %v783 = vcombine.high %v775, %v775
        %v784 = vcombine.high %v782, %v782
        %v786 = vunpack.c.l.s4 1966171168
        %v787 = vunpack.c.0.s8 %v786
        %v788 = vlaneseq
        %v789 = vshrl.u32 %v788, 7
        %v790 = vsub.s32 %v787, %v789
        %v791 = vrot.slane %v775, %v790
        %v793 = vunpack.c.l.s4 1966171168
        %v794 = vunpack.c.0.s8 %v793
        %v795 = vlaneseq
        %v796 = vshrl.u32 %v795, 7
        %v797 = vsub.s32 %v794, %v796
        %v798 = vrot.slane %v782, %v797
        %v800 = vunpack.c.l.s4 1966171168
        %v801 = vunpack.c.0.s8 %v800
        %v802 = vlaneseq
        %v803 = vshrl.u32 %v802, 7
        %v804 = vsub.s32 %v801, %v803
        %v805 = vrot.slane %v783, %v804
        %v807 = vunpack.c.l.s4 1966171168
        %v808 = vunpack.c.0.s8 %v807
        %v809 = vlaneseq
        %v810 = vshrl.u32 %v809, 7
        %v811 = vsub.s32 %v808, %v810
        %v812 = vrot.slane %v784, %v811
        %v813 = vcombine.high %v791, %v791
        %v814 = vcombine.high %v798, %v798
        %v815 = vcombine.high %v805, %v805
        %v816 = vcombine.high %v812, %v812
        %v817 = vlaneseq
        %v818 = vshrl.u32 %v817, 7
        %v819 = vsub.s32 0, %v818
        %v820 = vrot.slane %v791, %v819
        %v821 = vlaneseq
        %v822 = vshrl.u32 %v821, 7
        %v823 = vsub.s32 0, %v822
        %v824 = vrot.slane %v805, %v823
        %v825 = vlaneseq
        %v826 = vshrl.u32 %v825, 7
        %v827 = vsub.s32 0, %v826
        %v828 = vrot.slane %v813, %v827
        %v829 = vlaneseq
        %v830 = vshrl.u32 %v829, 7
        %v831 = vsub.s32 0, %v830
        %v832 = vrot.slane %v815, %v831
        %v833 = vlaneseq
        %v834 = vshrl.u32 %v833, 7
        %v835 = vsub.s32 0, %v834
        %v836 = vrot.slane %v798, %v835
        %v837 = vlaneseq
        %v838 = vshrl.u32 %v837, 7
        %v839 = vsub.s32 0, %v838
        %v840 = vrot.slane %v812, %v839
        %v841 = vlaneseq
        %v842 = vshrl.u32 %v841, 7
        %v843 = vsub.s32 0, %v842
        %v844 = vrot.slane %v814, %v843
        %v845 = vlaneseq
        %v846 = vshrl.u32 %v845, 7
        %v847 = vsub.s32 0, %v846
        %v848 = vrot.slane %v816, %v847
        %v857 = vadd.f32 %v643, %v820
        %v858 = vadd.f32 %v648, %v824
        %v859 = vadd.f32 %v653, %v828
        %v860 = vadd.f32 %v658, %v832
        %v861 = vadd.f32 %v663, %v836
        %v862 = vadd.f32 %v668, %v840
        %v863 = vadd.f32 %v673, %v844
        %v864 = vadd.f32 %v678, %v848
        %v865 = vtanh.pop %v857
        %v866 = vtanh.pop %v858
        %v867 = vtanh.pop %v859
        %v868 = vtanh.pop %v860
        %v869 = vtanh.pop %v861
        %v870 = vtanh.pop %v862
        %v871 = vtanh.pop %v863
        %v872 = vtanh.pop %v864
        %v873 = vld [vmem:[#allocation13] sm:$0x1]
        %v875 = vlaneseq
        %v876 = vshrl.u32 %v875, 7
        %v877 = vsub.s32 0, %v876
        %v878 = vrot.slane %v873, %v877
        %v880 = vmul.f32 %v865, %v878
        %v881 = vmul.f32 %v866, %v878
        %v882 = vmul.f32 %v867, %v878
        %v883 = vmul.f32 %v868, %v878
        %v884 = vmul.f32 %v869, %v878
        %v885 = vmul.f32 %v870, %v878
        %v886 = vmul.f32 %v871, %v878
        %v887 = vmul.f32 %v872, %v878
        %888 = vadd.xlane.f32.xlu0 %v880
        %v889 = vpop.xlane.xlu0 %888
        %890 = vadd.xlane.f32.xlu0 %v881
        %v891 = vpop.xlane.xlu0 %890
        %892 = vadd.xlane.f32.xlu0 %v882
        %v893 = vpop.xlane.xlu0 %892
        %894 = vadd.xlane.f32.xlu0 %v883
        %v895 = vpop.xlane.xlu0 %894
        %896 = vadd.xlane.f32.xlu0 %v884
        %v897 = vpop.xlane.xlu0 %896
        %898 = vadd.xlane.f32.xlu0 %v885
        %v899 = vpop.xlane.xlu0 %898
        %900 = vadd.xlane.f32.xlu0 %v886
        %v901 = vpop.xlane.xlu0 %900
        %902 = vadd.xlane.f32.xlu0 %v887
        %v903 = vpop.xlane.xlu0 %902
        %v912 = vlaneseq
        %v913 = vand.u32 %v912, 127
        %v914 = vlaneseq
        %v915 = vshrl.u32 %v914, 7
        %v916 = vsub.s32 %v913, %v915
        %v917 = vrot.slane %v889, %v916
        %v918 = vlaneseq
        %v919 = vshrl.u32 %v918, 7
        %v920 = vsub.s32 %v913, %v919
        %v921 = vrot.slane %v891, %v920
        %v922 = vlaneseq
        %v923 = vshrl.u32 %v922, 7
        %v924 = vsub.s32 %v913, %v923
        %v925 = vrot.slane %v893, %v924
        %v926 = vlaneseq
        %v927 = vshrl.u32 %v926, 7
        %v928 = vsub.s32 %v913, %v927
        %v929 = vrot.slane %v895, %v928
        %v930 = vlaneseq
        %v931 = vshrl.u32 %v930, 7
        %v932 = vsub.s32 %v913, %v931
        %v933 = vrot.slane %v897, %v932
        %v934 = vlaneseq
        %v935 = vshrl.u32 %v934, 7
        %v936 = vsub.s32 %v913, %v935
        %v937 = vrot.slane %v899, %v936
        %v938 = vlaneseq
        %v939 = vshrl.u32 %v938, 7
        %v940 = vsub.s32 %v913, %v939
        %v941 = vrot.slane %v901, %v940
        %v942 = vlaneseq
        %v943 = vshrl.u32 %v942, 7
        %v944 = vsub.s32 %v913, %v943
        %v945 = vrot.slane %v903, %v944
        %vm946 = vcmask 1041409
        %v947 = vsel %vm946, %v921, %v917
        %vm948 = vcmask 1042434
        %v949 = vsel %vm948, %v925, %v947
        %vm950 = vcmask 1043459
        %v951 = vsel %vm950, %v929, %v949
        %vm952 = vcmask 1044484
        %v953 = vsel %vm952, %v933, %v951
        %vm954 = vcmask 1045509
        %v955 = vsel %vm954, %v937, %v953
        %vm956 = vcmask 1046534
        %v957 = vsel %vm956, %v941, %v955
        %vm958 = vcmask 1047559
        %v959 = vsel %vm958, %v945, %v957
        %vm961 = vcmask 64512
        %v962 = vsel %vm961, %v959, -inf
        %963 = vmax.xlane.f32.xlu0 %v962
        %v964 = vpop.xlane.xlu0 %963
        %v966 = vlaneseq
        %v967 = vshrl.u32 %v966, 7
        %v968 = vsub.s32 0, %v967
        %v969 = vrot.slane %v964, %v968
        %v970 = vlaneseq
        %v971 = vshrl.u32 %v970, 7
        %v972 = vsub.s32 1, %v971
        %v973 = vrot.slane %v964, %v972
        %v974 = vlaneseq
        %v975 = vshrl.u32 %v974, 7
        %v976 = vsub.s32 2, %v975
        %v977 = vrot.slane %v964, %v976
        %v978 = vlaneseq
        %v979 = vshrl.u32 %v978, 7
        %v980 = vsub.s32 3, %v979
        %v981 = vrot.slane %v964, %v980
        %v982 = vlaneseq
        %v983 = vshrl.u32 %v982, 7
        %v984 = vsub.s32 4, %v983
        %v985 = vrot.slane %v964, %v984
        %v986 = vlaneseq
        %v987 = vshrl.u32 %v986, 7
        %v988 = vsub.s32 5, %v987
        %v989 = vrot.slane %v964, %v988
        %v990 = vlaneseq
        %v991 = vshrl.u32 %v990, 7
        %v992 = vsub.s32 6, %v991
        %v993 = vrot.slane %v964, %v992
        %v994 = vlaneseq
        %v995 = vshrl.u32 %v994, 7
        %v996 = vsub.s32 7, %v995
        %v997 = vrot.slane %v964, %v996
        %v1006 = vsub.f32 %v889, %v969
        %v1007 = vsub.f32 %v891, %v973
        %v1008 = vsub.f32 %v893, %v977
        %v1009 = vsub.f32 %v895, %v981
        %v1010 = vsub.f32 %v897, %v985
        %v1011 = vsub.f32 %v899, %v989
        %v1012 = vsub.f32 %v901, %v993
        %v1013 = vsub.f32 %v903, %v997
        %v1014 = vmul.f32 %v1006, 1.442695
        %v1015 = vpow.pop %v1014
        %v1016 = vmul.f32 %v1007, 1.442695
        %v1017 = vpow.pop %v1016
        %v1018 = vmul.f32 %v1008, 1.442695
        %v1019 = vpow.pop %v1018
        %v1020 = vmul.f32 %v1009, 1.442695
        %v1021 = vpow.pop %v1020
        %v1022 = vmul.f32 %v1010, 1.442695
        %v1023 = vpow.pop %v1022
        %v1024 = vmul.f32 %v1011, 1.442695
        %v1025 = vpow.pop %v1024
        %v1026 = vmul.f32 %v1012, 1.442695
        %v1027 = vpow.pop %v1026
        %v1028 = vmul.f32 %v1013, 1.442695
        %v1029 = vpow.pop %v1028
        %1038 = vset.pattern.permute.xlu0 0
        %1039 = vperm.xlu0 %1038, %v1015
        %v1040 = vpop.permute.xlu0 %1039
        %1041 = vset.pattern.permute.xlu0 0
        %1042 = vperm.xlu0 %1041, %v1017
        %v1043 = vpop.permute.xlu0 %1042
        %1044 = vset.pattern.permute.xlu0 0
        %1045 = vperm.xlu0 %1044, %v1019
        %v1046 = vpop.permute.xlu0 %1045
        %1047 = vset.pattern.permute.xlu0 0
        %1048 = vperm.xlu0 %1047, %v1021
        %v1049 = vpop.permute.xlu0 %1048
        %1050 = vset.pattern.permute.xlu0 0
        %1051 = vperm.xlu0 %1050, %v1023
        %v1052 = vpop.permute.xlu0 %1051
        %1053 = vset.pattern.permute.xlu0 0
        %1054 = vperm.xlu0 %1053, %v1025
        %v1055 = vpop.permute.xlu0 %1054
        %1056 = vset.pattern.permute.xlu0 0
        %1057 = vperm.xlu0 %1056, %v1027
        %v1058 = vpop.permute.xlu0 %1057
        %1059 = vset.pattern.permute.xlu0 0
        %1060 = vperm.xlu0 %1059, %v1029
        %v1061 = vpop.permute.xlu0 %1060
        %v1062 = vlaneseq
        %v1063 = vshrl.u32 %v1062, 7
        %v1064 = vsub.s32 %v913, %v1063
        %v1065 = vrot.slane %v1040, %v1064
        %v1066 = vlaneseq
        %v1067 = vshrl.u32 %v1066, 7
        %v1068 = vsub.s32 %v913, %v1067
        %v1069 = vrot.slane %v1043, %v1068
        %v1070 = vlaneseq
        %v1071 = vshrl.u32 %v1070, 7
        %v1072 = vsub.s32 %v913, %v1071
        %v1073 = vrot.slane %v1046, %v1072
        %v1074 = vlaneseq
        %v1075 = vshrl.u32 %v1074, 7
        %v1076 = vsub.s32 %v913, %v1075
        %v1077 = vrot.slane %v1049, %v1076
        %v1078 = vlaneseq
        %v1079 = vshrl.u32 %v1078, 7
        %v1080 = vsub.s32 %v913, %v1079
        %v1081 = vrot.slane %v1052, %v1080
        %v1082 = vlaneseq
        %v1083 = vshrl.u32 %v1082, 7
        %v1084 = vsub.s32 %v913, %v1083
        %v1085 = vrot.slane %v1055, %v1084
        %v1086 = vlaneseq
        %v1087 = vshrl.u32 %v1086, 7
        %v1088 = vsub.s32 %v913, %v1087
        %v1089 = vrot.slane %v1058, %v1088
        %v1090 = vlaneseq
        %v1091 = vshrl.u32 %v1090, 7
        %v1092 = vsub.s32 %v913, %v1091
        %v1093 = vrot.slane %v1061, %v1092
        %v1094 = vsel %vm946, %v1069, %v1065
        %v1095 = vsel %vm948, %v1073, %v1094
        %v1096 = vsel %vm950, %v1077, %v1095
        %v1097 = vsel %vm952, %v1081, %v1096
        %v1098 = vsel %vm954, %v1085, %v1097
        %v1099 = vsel %vm956, %v1089, %v1098
        %v1100 = vsel %vm958, %v1093, %v1099
        %v1102 = vsel %vm961, %v1100, 0.0
        %1103 = vadd.xlane.f32.xlu0 %v1102
        %v1104 = vpop.xlane.xlu0 %1103
        %v1105 = vrcp.pop %v1104
        %v1107 = vlaneseq
        %v1108 = vshrl.u32 %v1107, 7
        %v1109 = vsub.s32 0, %v1108
        %v1110 = vrot.slane %v1105, %v1109
        %v1111 = vlaneseq
        %v1112 = vshrl.u32 %v1111, 7
        %v1113 = vsub.s32 1, %v1112
        %v1114 = vrot.slane %v1105, %v1113
        %v1115 = vlaneseq
        %v1116 = vshrl.u32 %v1115, 7
        %v1117 = vsub.s32 2, %v1116
        %v1118 = vrot.slane %v1105, %v1117
        %v1119 = vlaneseq
        %v1120 = vshrl.u32 %v1119, 7
        %v1121 = vsub.s32 3, %v1120
        %v1122 = vrot.slane %v1105, %v1121
        %v1123 = vlaneseq
        %v1124 = vshrl.u32 %v1123, 7
        %v1125 = vsub.s32 4, %v1124
        %v1126 = vrot.slane %v1105, %v1125
        %v1127 = vlaneseq
        %v1128 = vshrl.u32 %v1127, 7
        %v1129 = vsub.s32 5, %v1128
        %v1130 = vrot.slane %v1105, %v1129
        %v1131 = vlaneseq
        %v1132 = vshrl.u32 %v1131, 7
        %v1133 = vsub.s32 6, %v1132
        %v1134 = vrot.slane %v1105, %v1133
        %v1135 = vlaneseq
        %v1136 = vshrl.u32 %v1135, 7
        %v1137 = vsub.s32 7, %v1136
        %v1138 = vrot.slane %v1105, %v1137
        %v1147 = vmul.f32 %v1015, %v1110
        %v1148 = vmul.f32 %v1017, %v1114
        %v1149 = vmul.f32 %v1019, %v1118
        %v1150 = vmul.f32 %v1021, %v1122
        %v1151 = vmul.f32 %v1023, %v1126
        %v1152 = vmul.f32 %v1025, %v1130
        %v1153 = vmul.f32 %v1027, %v1134
        %v1154 = vmul.f32 %v1029, %v1138
        %1156 = vset.pattern.permute.xlu0 0
        %1157 = vperm.xlu0 %1156, %v1147
        %v1158 = vpop.permute.xlu0 %1157
        %1161 = vset.pattern.permute.xlu0 0
        %1162 = vperm.xlu0 %1161, %v1148
        %v1163 = vpop.permute.xlu0 %1162
        %1166 = vset.pattern.permute.xlu0 0
        %1167 = vperm.xlu0 %1166, %v1149
        %v1168 = vpop.permute.xlu0 %1167
        %1171 = vset.pattern.permute.xlu0 0
        %1172 = vperm.xlu0 %1171, %v1150
        %v1173 = vpop.permute.xlu0 %1172
        %1176 = vset.pattern.permute.xlu0 0
        %1177 = vperm.xlu0 %1176, %v1151
        %v1178 = vpop.permute.xlu0 %1177
        %1181 = vset.pattern.permute.xlu0 0
        %1182 = vperm.xlu0 %1181, %v1152
        %v1183 = vpop.permute.xlu0 %1182
        %1186 = vset.pattern.permute.xlu0 0
        %1187 = vperm.xlu0 %1186, %v1153
        %v1188 = vpop.permute.xlu0 %1187
        %1191 = vset.pattern.permute.xlu0 0
        %1192 = vperm.xlu0 %1191, %v1154
        %v1193 = vpop.permute.xlu0 %1192
        %v1195 = vmul.f32 %v1158, %v544
        %v1196 = vmul.f32 %v1163, %v545
        %v1197 = vmul.f32 %v1168, %v546
        %v1198 = vmul.f32 %v1173, %v547
        %v1199 = vmul.f32 %v1178, %v548
        %v1200 = vmul.f32 %v1183, %v549
        %v1201 = vmul.f32 %v1188, %v550
        %v1202 = vmul.f32 %v1193, %v551
        %v1203 = vrot.slane %v1195, 4
        %v1204 = vadd.f32 %v1195, %v1203
        %v1205 = vrot.slane %v1204, 2
        %v1206 = vadd.f32 %v1204, %v1205
        %v1207 = vrot.slane %v1206, 1
        %v1208 = vadd.f32 %v1206, %v1207
        %v1209 = vrot.slane %v1196, 4
        %v1210 = vadd.f32 %v1196, %v1209
        %v1211 = vrot.slane %v1210, 2
        %v1212 = vadd.f32 %v1210, %v1211
        %v1213 = vrot.slane %v1212, 1
        %v1214 = vadd.f32 %v1212, %v1213
        %v1215 = vrot.slane %v1197, 4
        %v1216 = vadd.f32 %v1197, %v1215
        %v1217 = vrot.slane %v1216, 2
        %v1218 = vadd.f32 %v1216, %v1217
        %v1219 = vrot.slane %v1218, 1
        %v1220 = vadd.f32 %v1218, %v1219
        %v1221 = vrot.slane %v1198, 4
        %v1222 = vadd.f32 %v1198, %v1221
        %v1223 = vrot.slane %v1222, 2
        %v1224 = vadd.f32 %v1222, %v1223
        %v1225 = vrot.slane %v1224, 1
        %v1226 = vadd.f32 %v1224, %v1225
        %v1227 = vrot.slane %v1199, 4
        %v1228 = vadd.f32 %v1199, %v1227
        %v1229 = vrot.slane %v1228, 2
        %v1230 = vadd.f32 %v1228, %v1229
        %v1231 = vrot.slane %v1230, 1
        %v1232 = vadd.f32 %v1230, %v1231
        %v1233 = vrot.slane %v1200, 4
        %v1234 = vadd.f32 %v1200, %v1233
        %v1235 = vrot.slane %v1234, 2
        %v1236 = vadd.f32 %v1234, %v1235
        %v1237 = vrot.slane %v1236, 1
        %v1238 = vadd.f32 %v1236, %v1237
        %v1239 = vrot.slane %v1201, 4
        %v1240 = vadd.f32 %v1201, %v1239
        %v1241 = vrot.slane %v1240, 2
        %v1242 = vadd.f32 %v1240, %v1241
        %v1243 = vrot.slane %v1242, 1
        %v1244 = vadd.f32 %v1242, %v1243
        %v1245 = vrot.slane %v1202, 4
        %v1246 = vadd.f32 %v1202, %v1245
        %v1247 = vrot.slane %v1246, 2
        %v1248 = vadd.f32 %v1246, %v1247
        %v1249 = vrot.slane %v1248, 1
        %v1250 = vadd.f32 %v1248, %v1249
        %v1259 = vsel %vm946, %v1214, %v1208
        %v1260 = vsel %vm948, %v1220, %v1259
        %v1261 = vsel %vm950, %v1226, %v1260
        %v1262 = vsel %vm952, %v1232, %v1261
        %v1263 = vsel %vm954, %v1238, %v1262
        %v1264 = vsel %vm956, %v1244, %v1263
        %v1265 = vsel %vm958, %v1250, %v1264
        %v1267 = vld [vmem:[#allocation15] sm:$0xff]
        %v1268 = vld [vmem:[#allocation15 + $0x8] sm:$0xff]
        %v1269 = vld [vmem:[#allocation15 + $0x10] sm:$0xff]
        %v1270 = vld [vmem:[#allocation15 + $0x18] sm:$0xff]
        %v1271 = vld [vmem:[#allocation15 + $0x20] sm:$0xff]
        %v1272 = vld [vmem:[#allocation15 + $0x28] sm:$0xff]
        %v1273 = vld [vmem:[#allocation15 + $0x30] sm:$0xff]
        %v1274 = vld [vmem:[#allocation15 + $0x38] sm:$0xff]
        %v1275 = vld [vmem:[#allocation15 + $0x40] sm:$0xff]
        %v1276 = vld [vmem:[#allocation15 + $0x48] sm:$0xff]
        %v1277 = vld [vmem:[#allocation15 + $0x50] sm:$0xff]
        %v1278 = vld [vmem:[#allocation15 + $0x58] sm:$0xff]
        %v1279 = vld [vmem:[#allocation15 + $0x60] sm:$0xff]
        %v1280 = vld [vmem:[#allocation15 + $0x68] sm:$0xff]
        %v1281 = vld [vmem:[#allocation15 + $0x70] sm:$0xff]
        %v1282 = vld [vmem:[#allocation15 + $0x78] sm:$0xff]
        %v1283 = vld [vmem:[#allocation15 + $0x80] sm:$0xff]
        %v1284 = vld [vmem:[#allocation15 + $0x88] sm:$0xff]
        %v1285 = vld [vmem:[#allocation15 + $0x90] sm:$0xff]
        %v1286 = vld [vmem:[#allocation15 + $0x98] sm:$0xff]
        %v1287 = vld [vmem:[#allocation15 + $0xa0] sm:$0xff]
        %v1288 = vld [vmem:[#allocation15 + $0xa8] sm:$0xff]
        %v1289 = vld [vmem:[#allocation15 + $0xb0] sm:$0xff]
        %v1290 = vld [vmem:[#allocation15 + $0xb8] sm:$0xff]
        %v1291 = vld [vmem:[#allocation15 + $0xc0] sm:$0xff]
        %v1292 = vld [vmem:[#allocation15 + $0xc8] sm:$0xff]
        %v1293 = vld [vmem:[#allocation15 + $0xd0] sm:$0xff]
        %v1294 = vld [vmem:[#allocation15 + $0xd8] sm:$0xff]
        %v1295 = vld [vmem:[#allocation15 + $0xe0] sm:$0xff]
        %v1296 = vld [vmem:[#allocation15 + $0xe8] sm:$0xff]
        %v1297 = vld [vmem:[#allocation15 + $0xf0] sm:$0xff]
        %v1298 = vld [vmem:[#allocation15 + $0xf8] sm:$0xff]
        %v1299 = vld [vmem:[#allocation15 + $0x100] sm:$0xff]
        %v1300 = vld [vmem:[#allocation15 + $0x108] sm:$0xff]
        %v1301 = vld [vmem:[#allocation15 + $0x110] sm:$0xff]
        %v1302 = vld [vmem:[#allocation15 + $0x118] sm:$0xff]
        %v1303 = vld [vmem:[#allocation15 + $0x120] sm:$0xff]
        %v1304 = vld [vmem:[#allocation15 + $0x128] sm:$0xff]
        %v1305 = vld [vmem:[#allocation15 + $0x130] sm:$0xff]
        %v1306 = vld [vmem:[#allocation15 + $0x138] sm:$0xff]
        %v1307 = vld [vmem:[#allocation15 + $0x140] sm:$0xff]
        %v1308 = vld [vmem:[#allocation15 + $0x148] sm:$0xff]
        %v1309 = vld [vmem:[#allocation15 + $0x150] sm:$0xff]
        %v1310 = vld [vmem:[#allocation15 + $0x158] sm:$0xff]
        %v1311 = vld [vmem:[#allocation15 + $0x160] sm:$0xff]
        %v1312 = vld [vmem:[#allocation15 + $0x168] sm:$0xff]
        %v1313 = vld [vmem:[#allocation15 + $0x170] sm:$0xff]
        %v1314 = vld [vmem:[#allocation15 + $0x178] sm:$0xff]
        %v1315 = vld [vmem:[#allocation15 + $0x180] sm:$0xff]
        %v1316 = vld [vmem:[#allocation15 + $0x188] sm:$0xff]
        %v1317 = vld [vmem:[#allocation15 + $0x190] sm:$0xff]
        %v1318 = vld [vmem:[#allocation15 + $0x198] sm:$0xff]
        %v1319 = vld [vmem:[#allocation15 + $0x1a0] sm:$0xff]
        %v1320 = vld [vmem:[#allocation15 + $0x1a8] sm:$0xff]
        %v1321 = vld [vmem:[#allocation15 + $0x1b0] sm:$0xff]
        %v1322 = vld [vmem:[#allocation15 + $0x1b8] sm:$0xff]
        %v1323 = vld [vmem:[#allocation15 + $0x1c0] sm:$0xff]
        %v1324 = vld [vmem:[#allocation15 + $0x1c8] sm:$0xff]
        %v1325 = vld [vmem:[#allocation15 + $0x1d0] sm:$0xff]
        %v1326 = vld [vmem:[#allocation15 + $0x1d8] sm:$0xff]
        %v1327 = vld [vmem:[#allocation15 + $0x1e0] sm:$0xff]
        %v1328 = vld [vmem:[#allocation15 + $0x1e8] sm:$0xff]
        %v1329 = vld [vmem:[#allocation15 + $0x1f0] sm:$0xff]
        %v1330 = vld [vmem:[#allocation15 + $0x1f8] sm:$0xff]
        %v1331 = vld [vmem:[#allocation15 + $0x200] sm:$0xff]
        %v1332 = vld [vmem:[#allocation15 + $0x208] sm:$0xff]
        %v1333 = vld [vmem:[#allocation15 + $0x210] sm:$0xff]
        %v1334 = vld [vmem:[#allocation15 + $0x218] sm:$0xff]
        %v1335 = vld [vmem:[#allocation15 + $0x220] sm:$0xff]
        %v1336 = vld [vmem:[#allocation15 + $0x228] sm:$0xff]
        %v1337 = vld [vmem:[#allocation15 + $0x230] sm:$0xff]
        %v1338 = vld [vmem:[#allocation15 + $0x238] sm:$0xff]
        %v1339 = vld [vmem:[#allocation15 + $0x240] sm:$0xff]
        %v1340 = vld [vmem:[#allocation15 + $0x248] sm:$0xff]
        %v1341 = vld [vmem:[#allocation15 + $0x250] sm:$0xff]
        %v1342 = vld [vmem:[#allocation15 + $0x258] sm:$0xff]
        %v1343 = vld [vmem:[#allocation15 + $0x260] sm:$0xff]
        %v1344 = vld [vmem:[#allocation15 + $0x268] sm:$0xff]
        %v1345 = vld [vmem:[#allocation15 + $0x270] sm:$0xff]
        %v1346 = vld [vmem:[#allocation15 + $0x278] sm:$0xff]
        %v1347 = vld [vmem:[#allocation15 + $0x280] sm:$0xff]
        %v1348 = vld [vmem:[#allocation15 + $0x288] sm:$0xff]
        %v1349 = vld [vmem:[#allocation15 + $0x290] sm:$0xff]
        %v1350 = vld [vmem:[#allocation15 + $0x298] sm:$0xff]
        %v1351 = vld [vmem:[#allocation15 + $0x2a0] sm:$0xff]
        %v1352 = vld [vmem:[#allocation15 + $0x2a8] sm:$0xff]
        %v1353 = vld [vmem:[#allocation15 + $0x2b0] sm:$0xff]
        %v1354 = vld [vmem:[#allocation15 + $0x2b8] sm:$0xff]
        %v1355 = vld [vmem:[#allocation15 + $0x2c0] sm:$0xff]
        %v1356 = vld [vmem:[#allocation15 + $0x2c8] sm:$0xff]
        %v1357 = vld [vmem:[#allocation15 + $0x2d0] sm:$0xff]
        %v1358 = vld [vmem:[#allocation15 + $0x2d8] sm:$0xff]
        %v1359 = vld [vmem:[#allocation15 + $0x2e0] sm:$0xff]
        %v1360 = vld [vmem:[#allocation15 + $0x2e8] sm:$0xff]
        %v1361 = vld [vmem:[#allocation15 + $0x2f0] sm:$0xff]
        %v1362 = vld [vmem:[#allocation15 + $0x2f8] sm:$0xff]
        %v1363 = vld [vmem:[#allocation15 + $0x300] sm:$0xff]
        %v1364 = vld [vmem:[#allocation15 + $0x308] sm:$0xff]
        %v1365 = vld [vmem:[#allocation15 + $0x310] sm:$0xff]
        %v1366 = vld [vmem:[#allocation15 + $0x318] sm:$0xff]
        %v1367 = vld [vmem:[#allocation15 + $0x320] sm:$0xff]
        %v1368 = vld [vmem:[#allocation15 + $0x328] sm:$0xff]
        %v1369 = vld [vmem:[#allocation15 + $0x330] sm:$0xff]
        %v1370 = vld [vmem:[#allocation15 + $0x338] sm:$0xff]
        %v1371 = vld [vmem:[#allocation15 + $0x340] sm:$0xff]
        %v1372 = vld [vmem:[#allocation15 + $0x348] sm:$0xff]
        %v1373 = vld [vmem:[#allocation15 + $0x350] sm:$0xff]
        %v1374 = vld [vmem:[#allocation15 + $0x358] sm:$0xff]
        %v1375 = vld [vmem:[#allocation15 + $0x360] sm:$0xff]
        %v1376 = vld [vmem:[#allocation15 + $0x368] sm:$0xff]
        %v1377 = vld [vmem:[#allocation15 + $0x370] sm:$0xff]
        %v1378 = vld [vmem:[#allocation15 + $0x378] sm:$0xff]
        %v1379 = vld [vmem:[#allocation15 + $0x380] sm:$0xff]
        %v1380 = vld [vmem:[#allocation15 + $0x388] sm:$0xff]
        %v1381 = vld [vmem:[#allocation15 + $0x390] sm:$0xff]
        %v1382 = vld [vmem:[#allocation15 + $0x398] sm:$0xff]
        %v1383 = vld [vmem:[#allocation15 + $0x3a0] sm:$0xff]
        %v1384 = vld [vmem:[#allocation15 + $0x3a8] sm:$0xff]
        %v1385 = vld [vmem:[#allocation15 + $0x3b0] sm:$0xff]
        %v1386 = vld [vmem:[#allocation15 + $0x3b8] sm:$0xff]
        %v1387 = vld [vmem:[#allocation15 + $0x3c0] sm:$0xff]
        %v1388 = vld [vmem:[#allocation15 + $0x3c8] sm:$0xff]
        %v1389 = vld [vmem:[#allocation15 + $0x3d0] sm:$0xff]
        %v1390 = vld [vmem:[#allocation15 + $0x3d8] sm:$0xff]
        %v1391 = vld [vmem:[#allocation15 + $0x3e0] sm:$0xff]
        %v1392 = vld [vmem:[#allocation15 + $0x3e8] sm:$0xff]
        %v1393 = vld [vmem:[#allocation15 + $0x3f0] sm:$0xff]
        %v1394 = vld [vmem:[#allocation15 + $0x3f8] sm:$0xff]
        %v1395 = vld [vmem:[#allocation15 + $0x400] sm:$0xff]
        %v1396 = vld [vmem:[#allocation15 + $0x408] sm:$0xff]
        %v1397 = vld [vmem:[#allocation15 + $0x410] sm:$0xff]
        %v1398 = vld [vmem:[#allocation15 + $0x418] sm:$0xff]
        %v1399 = vld [vmem:[#allocation15 + $0x420] sm:$0xff]
        %v1400 = vld [vmem:[#allocation15 + $0x428] sm:$0xff]
        %v1401 = vld [vmem:[#allocation15 + $0x430] sm:$0xff]
        %v1402 = vld [vmem:[#allocation15 + $0x438] sm:$0xff]
        %v1403 = vld [vmem:[#allocation15 + $0x440] sm:$0xff]
        %v1404 = vld [vmem:[#allocation15 + $0x448] sm:$0xff]
        %v1405 = vld [vmem:[#allocation15 + $0x450] sm:$0xff]
        %v1406 = vld [vmem:[#allocation15 + $0x458] sm:$0xff]
        %v1407 = vld [vmem:[#allocation15 + $0x460] sm:$0xff]
        %v1408 = vld [vmem:[#allocation15 + $0x468] sm:$0xff]
        %v1409 = vld [vmem:[#allocation15 + $0x470] sm:$0xff]
        %v1410 = vld [vmem:[#allocation15 + $0x478] sm:$0xff]
        %v1411 = vld [vmem:[#allocation15 + $0x480] sm:$0xff]
        %v1412 = vld [vmem:[#allocation15 + $0x488] sm:$0xff]
        %v1413 = vld [vmem:[#allocation15 + $0x490] sm:$0xff]
        %v1414 = vld [vmem:[#allocation15 + $0x498] sm:$0xff]
        %v1415 = vld [vmem:[#allocation15 + $0x4a0] sm:$0xff]
        %v1416 = vld [vmem:[#allocation15 + $0x4a8] sm:$0xff]
        %v1417 = vld [vmem:[#allocation15 + $0x4b0] sm:$0xff]
        %v1418 = vld [vmem:[#allocation15 + $0x4b8] sm:$0xff]
        %v1419 = vld [vmem:[#allocation15 + $0x4c0] sm:$0xff]
        %v1420 = vld [vmem:[#allocation15 + $0x4c8] sm:$0xff]
        %v1421 = vld [vmem:[#allocation15 + $0x4d0] sm:$0xff]
        %v1422 = vld [vmem:[#allocation15 + $0x4d8] sm:$0xff]
        %v1423 = vld [vmem:[#allocation15 + $0x4e0] sm:$0xff]
        %v1424 = vld [vmem:[#allocation15 + $0x4e8] sm:$0xff]
        %v1425 = vld [vmem:[#allocation15 + $0x4f0] sm:$0xff]
        %v1426 = vld [vmem:[#allocation15 + $0x4f8] sm:$0xff]
        %v1427 = vld [vmem:[#allocation15 + $0x500] sm:$0xff]
        %v1428 = vld [vmem:[#allocation15 + $0x508] sm:$0xff]
        %v1429 = vld [vmem:[#allocation15 + $0x510] sm:$0xff]
        %v1430 = vld [vmem:[#allocation15 + $0x518] sm:$0xff]
        %v1431 = vld [vmem:[#allocation15 + $0x520] sm:$0xff]
        %v1432 = vld [vmem:[#allocation15 + $0x528] sm:$0xff]
        %v1433 = vld [vmem:[#allocation15 + $0x530] sm:$0xff]
        %v1434 = vld [vmem:[#allocation15 + $0x538] sm:$0xff]
        %v1435 = vld [vmem:[#allocation15 + $0x540] sm:$0xff]
        %v1436 = vld [vmem:[#allocation15 + $0x548] sm:$0xff]
        %v1437 = vld [vmem:[#allocation15 + $0x550] sm:$0xff]
        %v1438 = vld [vmem:[#allocation15 + $0x558] sm:$0xff]
        %v1439 = vld [vmem:[#allocation15 + $0x560] sm:$0xff]
        %v1440 = vld [vmem:[#allocation15 + $0x568] sm:$0xff]
        %v1441 = vld [vmem:[#allocation15 + $0x570] sm:$0xff]
        %v1442 = vld [vmem:[#allocation15 + $0x578] sm:$0xff]
        %v1443 = vld [vmem:[#allocation15 + $0x580] sm:$0xff]
        %v1444 = vld [vmem:[#allocation15 + $0x588] sm:$0xff]
        %v1445 = vld [vmem:[#allocation15 + $0x590] sm:$0xff]
        %v1446 = vld [vmem:[#allocation15 + $0x598] sm:$0xff]
        %v1447 = vld [vmem:[#allocation15 + $0x5a0] sm:$0xff]
        %v1448 = vld [vmem:[#allocation15 + $0x5a8] sm:$0xff]
        %v1449 = vld [vmem:[#allocation15 + $0x5b0] sm:$0xff]
        %v1450 = vld [vmem:[#allocation15 + $0x5b8] sm:$0xff]
        %v1451 = vld [vmem:[#allocation15 + $0x5c0] sm:$0xff]
        %v1452 = vld [vmem:[#allocation15 + $0x5c8] sm:$0xff]
        %v1453 = vld [vmem:[#allocation15 + $0x5d0] sm:$0xff]
        %v1454 = vld [vmem:[#allocation15 + $0x5d8] sm:$0xff]
        %v1455 = vld [vmem:[#allocation15 + $0x5e0] sm:$0xff]
        %v1456 = vld [vmem:[#allocation15 + $0x5e8] sm:$0xff]
        %v1457 = vld [vmem:[#allocation15 + $0x5f0] sm:$0xff]
        %v1458 = vld [vmem:[#allocation15 + $0x5f8] sm:$0xff]
        %v1459 = vld [vmem:[#allocation16] sm:$0xf]
        %v1461 = vlaneseq
        %v1462 = vshrl.u32 %v1461, 7
        %v1463 = vsub.s32 0, %v1462
        %v1464 = vrot.slane %v1459, %v1463
        %v1465 = vlaneseq
        %v1466 = vshrl.u32 %v1465, 7
        %v1467 = vsub.s32 1, %v1466
        %v1468 = vrot.slane %v1459, %v1467
        %v1469 = vlaneseq
        %v1470 = vshrl.u32 %v1469, 7
        %v1471 = vsub.s32 2, %v1470
        %v1472 = vrot.slane %v1459, %v1471
        %v1473 = vlaneseq
        %v1474 = vshrl.u32 %v1473, 7
        %v1475 = vsub.s32 3, %v1474
        %v1476 = vrot.slane %v1459, %v1475
        %1481 = vmatprep.subr.mxu0 %v1268
        %1482 = vmatpush1.msra.mxu0 %v1267
        %1483 = vmatprep.subr.mxu0 %v1272
        %1484 = vmatpush1.msra.mxu0 %v1271
        %1485 = vmatprep.subr.mxu0 %v1276
        %1486 = vmatpush1.msra.mxu0 %v1275
        %1487 = vmatprep.subr.mxu0 %v1280
        %1488 = vmatpush1.msra.mxu0 %v1279
        %1489 = vmatprep.subr.mxu0 %v1284
        %1490 = vmatpush1.msra.mxu0 %v1283
        %1491 = vmatprep.subr.mxu0 %v1288
        %1492 = vmatpush1.msra.mxu0 %v1287
        %1493 = vmatprep.subr.mxu0 %v1292
        %1494 = vmatpush1.msra.mxu0 %v1291
        %1495 = vmatprep.subr.mxu0 %v1296
        %1496 = vmatpush1.msra.mxu0 %v1295
        %1497 = vmatprep.subr.mxu0 %v1300
        %1498 = vmatpush1.msra.mxu0 %v1299
        %1499 = vmatprep.subr.mxu0 %v1304
        %1500 = vmatpush1.msra.mxu0 %v1303
        %1501 = vmatprep.subr.mxu0 %v1308
        %1502 = vmatpush1.msra.mxu0 %v1307
        %1503 = vmatprep.subr.mxu0 %v1312
        %1504 = vmatpush1.msra.mxu0 %v1311
        %1505 = vmatprep.subr.mxu0 %v1316
        %1506 = vmatpush1.msra.mxu0 %v1315
        %1507 = vmatprep.subr.mxu0 %v1320
        %1508 = vmatpush1.msra.mxu0 %v1319
        %1509 = vmatprep.subr.mxu0 %v1324
        %1510 = vmatpush1.msra.mxu0 %v1323
        %1511 = vmatprep.subr.mxu0 %v1328
        %1512 = vmatpush1.msra.mxu0 %v1327
        %1513 = vmatprep.subr.mxu0 %v1332
        %1514 = vmatpush1.msra.mxu0 %v1331
        %1515 = vmatprep.subr.mxu0 %v1336
        %1516 = vmatpush1.msra.mxu0 %v1335
        %1517 = vmatprep.subr.mxu0 %v1340
        %1518 = vmatpush1.msra.mxu0 %v1339
        %1519 = vmatprep.subr.mxu0 %v1344
        %1520 = vmatpush1.msra.mxu0 %v1343
        %1521 = vmatprep.subr.mxu0 %v1348
        %1522 = vmatpush1.msra.mxu0 %v1347
        %1523 = vmatprep.subr.mxu0 %v1352
        %1524 = vmatpush1.msra.mxu0 %v1351
        %1525 = vmatprep.subr.mxu0 %v1356
        %1526 = vmatpush1.msra.mxu0 %v1355
        %1527 = vmatprep.subr.mxu0 %v1360
        %1528 = vmatpush1.msra.mxu0 %v1359
        %1529 = vmatprep.subr.mxu0 %v1364
        %1530 = vmatpush1.msra.mxu0 %v1363
        %1531 = vmatprep.subr.mxu0 %v1368
        %1532 = vmatpush1.msra.mxu0 %v1367
        %1533 = vmatprep.subr.mxu0 %v1372
        %1534 = vmatpush1.msra.mxu0 %v1371
        %1535 = vmatprep.subr.mxu0 %v1376
        %1536 = vmatpush1.msra.mxu0 %v1375
        %1537 = vmatprep.subr.mxu0 %v1380
        %1538 = vmatpush1.msra.mxu0 %v1379
        %1539 = vmatprep.subr.mxu0 %v1384
        %1540 = vmatpush1.msra.mxu0 %v1383
        %1541 = vmatprep.subr.mxu0 %v1388
        %1542 = vmatpush1.msra.mxu0 %v1387
        %1543 = vmatprep.subr.mxu0 %v1392
        %1544 = vmatpush1.msra.mxu0 %v1391
        %1545 = vmatprep.mubr.f32.mxu0 %v1265
        %1546 = vmatmul.mubr.f32.gmra.mrb[0].mxu0 %v541
        %v1547 = vpop.f32.mrb[0].mxu0
        %v1548 = vadd.f32 %v1464, %v1547
        %v1549 = vpop.f32.mrb[0].mxu0
        %v1550 = vadd.f32 %v1468, %v1549
        %1551 = vdwg.mxu0
        %1552 = vmatprep.subr.mxu0 %v1396
        %1553 = vmatpush1.msra.mxu0 %v1395
        %1554 = vmatprep.subr.mxu0 %v1400
        %1555 = vmatpush1.msra.mxu0 %v1399
        %1556 = vmatprep.subr.mxu0 %v1404
        %1557 = vmatpush1.msra.mxu0 %v1403
        %1558 = vmatprep.subr.mxu0 %v1408
        %1559 = vmatpush1.msra.mxu0 %v1407
        %1560 = vmatprep.subr.mxu0 %v1412
        %1561 = vmatpush1.msra.mxu0 %v1411
        %1562 = vmatprep.subr.mxu0 %v1416
        %1563 = vmatpush1.msra.mxu0 %v1415
        %1564 = vmatprep.subr.mxu0 %v1420
        %1565 = vmatpush1.msra.mxu0 %v1419
        %1566 = vmatprep.subr.mxu0 %v1424
        %1567 = vmatpush1.msra.mxu0 %v1423
        %1568 = vmatprep.subr.mxu0 %v1428
        %1569 = vmatpush1.msra.mxu0 %v1427
        %1570 = vmatprep.subr.mxu0 %v1432
        %1571 = vmatpush1.msra.mxu0 %v1431
        %1572 = vmatprep.subr.mxu0 %v1436
        %1573 = vmatpush1.msra.mxu0 %v1435
        %1574 = vmatprep.subr.mxu0 %v1440
        %1575 = vmatpush1.msra.mxu0 %v1439
        %1576 = vmatprep.subr.mxu0 %v1444
        %1577 = vmatpush1.msra.mxu0 %v1443
        %1578 = vmatprep.subr.mxu0 %v1448
        %1579 = vmatpush1.msra.mxu0 %v1447
        %1580 = vmatprep.subr.mxu0 %v1452
        %1581 = vmatpush1.msra.mxu0 %v1451
        %1582 = vmatprep.subr.mxu0 %v1456
        %1583 = vmatpush1.msra.mxu0 %v1455
        %1584 = vmatprep.subr.mxu0 0.0
        %1585 = vmatpush1.msra.mxu0 0.0
        %1586 = vmatprep.subr.mxu0 0.0
        %1587 = vmatpush1.msra.mxu0 0.0
        %1588 = vmatprep.subr.mxu0 0.0
        %1589 = vmatpush1.msra.mxu0 0.0
        %1590 = vmatprep.subr.mxu0 0.0
        %1591 = vmatpush1.msra.mxu0 0.0
        %1592 = vmatprep.subr.mxu0 0.0
        %1593 = vmatpush1.msra.mxu0 0.0
        %1594 = vmatprep.subr.mxu0 0.0
        %1595 = vmatpush1.msra.mxu0 0.0
        %1596 = vmatprep.subr.mxu0 0.0
        %1597 = vmatpush1.msra.mxu0 0.0
        %1598 = vmatprep.subr.mxu0 0.0
        %1599 = vmatpush1.msra.mxu0 0.0
        %1600 = vmatprep.subr.mxu0 0.0
        %1601 = vmatpush1.msra.mxu0 0.0
        %1602 = vmatprep.subr.mxu0 0.0
        %1603 = vmatpush1.msra.mxu0 0.0
        %1604 = vmatprep.subr.mxu0 0.0
        %1605 = vmatpush1.msra.mxu0 0.0
        %1606 = vmatprep.subr.mxu0 0.0
        %1607 = vmatpush1.msra.mxu0 0.0
        %1608 = vmatprep.subr.mxu0 0.0
        %1609 = vmatpush1.msra.mxu0 0.0
        %1610 = vmatprep.subr.mxu0 0.0
        %1611 = vmatpush1.msra.mxu0 0.0
        %1612 = vmatprep.subr.mxu0 0.0
        %1613 = vmatpush1.msra.mxu0 0.0
        %1614 = vmatprep.subr.mxu0 0.0
        %1615 = vmatpush1.msra.mxu0 0.0
        %1616 = vmatprep.mubr.f32.mxu0 0.0
        %1617 = vmatmul.mubr.f32.gmra.mrb[0].mxu0 %v542
        %v1618 = vpop.f32.mrb[0].mxu0
        %v1619 = vadd.f32 %v1548, %v1618
        %v1620 = vpop.f32.mrb[0].mxu0
        %v1621 = vadd.f32 %v1550, %v1620
        %1622 = vdwg.mxu0
        %1623 = vmatprep.subr.mxu0 %v1270
        %1624 = vmatpush1.msra.mxu0 %v1269
        %1625 = vmatprep.subr.mxu0 %v1274
        %1626 = vmatpush1.msra.mxu0 %v1273
        %1627 = vmatprep.subr.mxu0 %v1278
        %1628 = vmatpush1.msra.mxu0 %v1277
        %1629 = vmatprep.subr.mxu0 %v1282
        %1630 = vmatpush1.msra.mxu0 %v1281
        %1631 = vmatprep.subr.mxu0 %v1286
        %1632 = vmatpush1.msra.mxu0 %v1285
        %1633 = vmatprep.subr.mxu0 %v1290
        %1634 = vmatpush1.msra.mxu0 %v1289
        %1635 = vmatprep.subr.mxu0 %v1294
        %1636 = vmatpush1.msra.mxu0 %v1293
        %1637 = vmatprep.subr.mxu0 %v1298
        %1638 = vmatpush1.msra.mxu0 %v1297
        %1639 = vmatprep.subr.mxu0 %v1302
        %1640 = vmatpush1.msra.mxu0 %v1301
        %1641 = vmatprep.subr.mxu0 %v1306
        %1642 = vmatpush1.msra.mxu0 %v1305
        %1643 = vmatprep.subr.mxu0 %v1310
        %1644 = vmatpush1.msra.mxu0 %v1309
        %1645 = vmatprep.subr.mxu0 %v1314
        %1646 = vmatpush1.msra.mxu0 %v1313
        %1647 = vmatprep.subr.mxu0 %v1318
        %1648 = vmatpush1.msra.mxu0 %v1317
        %1649 = vmatprep.subr.mxu0 %v1322
        %1650 = vmatpush1.msra.mxu0 %v1321
        %1651 = vmatprep.subr.mxu0 %v1326
        %1652 = vmatpush1.msra.mxu0 %v1325
        %1653 = vmatprep.subr.mxu0 %v1330
        %1654 = vmatpush1.msra.mxu0 %v1329
        %1655 = vmatprep.subr.mxu0 %v1334
        %1656 = vmatpush1.msra.mxu0 %v1333
        %1657 = vmatprep.subr.mxu0 %v1338
        %1658 = vmatpush1.msra.mxu0 %v1337
        %1659 = vmatprep.subr.mxu0 %v1342
        %1660 = vmatpush1.msra.mxu0 %v1341
        %1661 = vmatprep.subr.mxu0 %v1346
        %1662 = vmatpush1.msra.mxu0 %v1345
        %1663 = vmatprep.subr.mxu0 %v1350
        %1664 = vmatpush1.msra.mxu0 %v1349
        %1665 = vmatprep.subr.mxu0 %v1354
        %1666 = vmatpush1.msra.mxu0 %v1353
        %1667 = vmatprep.subr.mxu0 %v1358
        %1668 = vmatpush1.msra.mxu0 %v1357
        %1669 = vmatprep.subr.mxu0 %v1362
        %1670 = vmatpush1.msra.mxu0 %v1361
        %1671 = vmatprep.subr.mxu0 %v1366
        %1672 = vmatpush1.msra.mxu0 %v1365
        %1673 = vmatprep.subr.mxu0 %v1370
        %1674 = vmatpush1.msra.mxu0 %v1369
        %1675 = vmatprep.subr.mxu0 %v1374
        %1676 = vmatpush1.msra.mxu0 %v1373
        %1677 = vmatprep.subr.mxu0 %v1378
        %1678 = vmatpush1.msra.mxu0 %v1377
        %1679 = vmatprep.subr.mxu0 %v1382
        %1680 = vmatpush1.msra.mxu0 %v1381
        %1681 = vmatprep.subr.mxu0 %v1386
        %1682 = vmatpush1.msra.mxu0 %v1385
        %1683 = vmatprep.subr.mxu0 %v1390
        %1684 = vmatpush1.msra.mxu0 %v1389
        %1685 = vmatprep.subr.mxu0 %v1394
        %1686 = vmatpush1.msra.mxu0 %v1393
        %1687 = vmatprep.mubr.f32.mxu0 %v1265
        %1688 = vmatmul.mubr.f32.gmra.mrb[0].mxu0 %v541
        %v1689 = vpop.f32.mrb[0].mxu0
        %v1690 = vadd.f32 %v1472, %v1689
        %v1691 = vpop.f32.mrb[0].mxu0
        %v1692 = vadd.f32 %v1476, %v1691
        %1693 = vdwg.mxu0
        %1694 = vmatprep.subr.mxu0 %v1398
        %1695 = vmatpush1.msra.mxu0 %v1397
        %1696 = vmatprep.subr.mxu0 %v1402
        %1697 = vmatpush1.msra.mxu0 %v1401
        %1698 = vmatprep.subr.mxu0 %v1406
        %1699 = vmatpush1.msra.mxu0 %v1405
        %1700 = vmatprep.subr.mxu0 %v1410
        %1701 = vmatpush1.msra.mxu0 %v1409
        %1702 = vmatprep.subr.mxu0 %v1414
        %1703 = vmatpush1.msra.mxu0 %v1413
        %1704 = vmatprep.subr.mxu0 %v1418
        %1705 = vmatpush1.msra.mxu0 %v1417
        %1706 = vmatprep.subr.mxu0 %v1422
        %1707 = vmatpush1.msra.mxu0 %v1421
        %1708 = vmatprep.subr.mxu0 %v1426
        %1709 = vmatpush1.msra.mxu0 %v1425
        %1710 = vmatprep.subr.mxu0 %v1430
        %1711 = vmatpush1.msra.mxu0 %v1429
        %1712 = vmatprep.subr.mxu0 %v1434
        %1713 = vmatpush1.msra.mxu0 %v1433
        %1714 = vmatprep.subr.mxu0 %v1438
        %1715 = vmatpush1.msra.mxu0 %v1437
        %1716 = vmatprep.subr.mxu0 %v1442
        %1717 = vmatpush1.msra.mxu0 %v1441
        %1718 = vmatprep.subr.mxu0 %v1446
        %1719 = vmatpush1.msra.mxu0 %v1445
        %1720 = vmatprep.subr.mxu0 %v1450
        %1721 = vmatpush1.msra.mxu0 %v1449
        %1722 = vmatprep.subr.mxu0 %v1454
        %1723 = vmatpush1.msra.mxu0 %v1453
        %1724 = vmatprep.subr.mxu0 %v1458
        %1725 = vmatpush1.msra.mxu0 %v1457
        %1726 = vmatprep.subr.mxu0 0.0
        %1727 = vmatpush1.msra.mxu0 0.0
        %1728 = vmatprep.subr.mxu0 0.0
        %1729 = vmatpush1.msra.mxu0 0.0
        %1730 = vmatprep.subr.mxu0 0.0
        %1731 = vmatpush1.msra.mxu0 0.0
        %1732 = vmatprep.subr.mxu0 0.0
        %1733 = vmatpush1.msra.mxu0 0.0
        %1734 = vmatprep.subr.mxu0 0.0
        %1735 = vmatpush1.msra.mxu0 0.0
        %1736 = vmatprep.subr.mxu0 0.0
        %1737 = vmatpush1.msra.mxu0 0.0
        %1738 = vmatprep.subr.mxu0 0.0
        %1739 = vmatpush1.msra.mxu0 0.0
        %1740 = vmatprep.subr.mxu0 0.0
        %1741 = vmatpush1.msra.mxu0 0.0
        %1742 = vmatprep.subr.mxu0 0.0
        %1743 = vmatpush1.msra.mxu0 0.0
        %1744 = vmatprep.subr.mxu0 0.0
        %1745 = vmatpush1.msra.mxu0 0.0
        %1746 = vmatprep.subr.mxu0 0.0
        %1747 = vmatpush1.msra.mxu0 0.0
        %1748 = vmatprep.subr.mxu0 0.0
        %1749 = vmatpush1.msra.mxu0 0.0
        %1750 = vmatprep.subr.mxu0 0.0
        %1751 = vmatpush1.msra.mxu0 0.0
        %1752 = vmatprep.subr.mxu0 0.0
        %1753 = vmatpush1.msra.mxu0 0.0
        %1754 = vmatprep.subr.mxu0 0.0
        %1755 = vmatpush1.msra.mxu0 0.0
        %1756 = vmatprep.subr.mxu0 0.0
        %1757 = vmatpush1.msra.mxu0 0.0
        %1758 = vmatprep.mubr.f32.mxu0 0.0
        %1759 = vmatmul.mubr.f32.gmra.mrb[0].mxu0 %v542
        %v1760 = vpop.f32.mrb[0].mxu0
        %v1761 = vadd.f32 %v1690, %v1760
        %v1762 = vpop.f32.mrb[0].mxu0
        %v1763 = vadd.f32 %v1692, %v1762
        %1764 = vdwg.mxu0
        %v1765 = vxor.u32 %v1619, 2147483648
        %v1766 = vmul.f32 %v1765, 1.442695
        %v1767 = vpow.pop %v1766
        %v1768 = vadd.f32 %v1767, 1.0
        %v1769 = vrcp.pop %v1768
        %v1770 = vmul.f32 1.0, %v1769
        %v1771 = vxor.u32 %v1621, 2147483648
        %v1772 = vmul.f32 %v1771, 1.442695
        %v1773 = vpow.pop %v1772
        %v1774 = vadd.f32 %v1773, 1.0
        %v1775 = vrcp.pop %v1774
        %v1776 = vmul.f32 1.0, %v1775
        %v1777 = vxor.u32 %v1761, 2147483648
        %v1778 = vmul.f32 %v1777, 1.442695
        %v1779 = vpow.pop %v1778
        %v1780 = vadd.f32 %v1779, 1.0
        %v1781 = vrcp.pop %v1780
        %v1782 = vmul.f32 1.0, %v1781
        %v1783 = vtanh.pop %v1763
        %v1784 = vmul.f32 %v1776, %v543
        %v1785 = vmul.f32 %v1770, %v1783
        %v1786 = vadd.f32 %v1784, %v1785
        %v1787 = vtanh.pop %v1786
        %v1788 = vmul.f32 %v1782, %v1787
        %1789 = vst [vmem:[#allocation2] sm:$0xff] %v1788
        %1790 = vst [vmem:[#allocation3] sm:$0xff] %v1786
        %v1791 = vld [vmem:[#allocation18] sm:$0xff]
        %v1792 = vld [vmem:[#allocation18 + $0x8] sm:$0xff]
        %v1793 = vld [vmem:[#allocation18 + $0x10] sm:$0xff]
        %v1794 = vld [vmem:[#allocation18 + $0x18] sm:$0xff]
        %v1795 = vld [vmem:[#allocation18 + $0x20] sm:$0xff]
        %v1796 = vld [vmem:[#allocation18 + $0x28] sm:$0xff]
        %v1797 = vld [vmem:[#allocation18 + $0x30] sm:$0xff]
        %v1798 = vld [vmem:[#allocation18 + $0x38] sm:$0xff]
        %v1799 = vld [vmem:[#allocation18 + $0x40] sm:$0xff]
        %v1800 = vld [vmem:[#allocation18 + $0x48] sm:$0xff]
        %v1801 = vld [vmem:[#allocation18 + $0x50] sm:$0xff]
        %v1802 = vld [vmem:[#allocation18 + $0x58] sm:$0xff]
        %v1803 = vld [vmem:[#allocation18 + $0x60] sm:$0xff]
        %v1804 = vld [vmem:[#allocation18 + $0x68] sm:$0xff]
        %v1805 = vld [vmem:[#allocation18 + $0x70] sm:$0xff]
        %v1806 = vld [vmem:[#allocation18 + $0x78] sm:$0xff]
        %v1807 = vld [vmem:[#allocation19] sm:$0x1]
        %v1809 = vlaneseq
        %v1810 = vshrl.u32 %v1809, 7
        %v1811 = vsub.s32 0, %v1810
        %v1812 = vrot.slane %v1807, %v1811
        %1814 = vmatprep.subr.mxu0 0.0
        %1815 = vmatpush1.msra.mxu0 %v1791
        %1816 = vmatprep.subr.mxu0 0.0
        %1817 = vmatpush1.msra.mxu0 %v1792
        %1818 = vmatprep.subr.mxu0 0.0
        %1819 = vmatpush1.msra.mxu0 %v1793
        %1820 = vmatprep.subr.mxu0 0.0
        %1821 = vmatpush1.msra.mxu0 %v1794
        %1822 = vmatprep.subr.mxu0 0.0
        %1823 = vmatpush1.msra.mxu0 %v1795
        %1824 = vmatprep.subr.mxu0 0.0
        %1825 = vmatpush1.msra.mxu0 %v1796
        %1826 = vmatprep.subr.mxu0 0.0
        %1827 = vmatpush1.msra.mxu0 %v1797
        %1828 = vmatprep.subr.mxu0 0.0
        %1829 = vmatpush1.msra.mxu0 %v1798
        %1830 = vmatprep.subr.mxu0 0.0
        %1831 = vmatpush1.msra.mxu0 %v1799
        %1832 = vmatprep.subr.mxu0 0.0
        %1833 = vmatpush1.msra.mxu0 %v1800
        %1834 = vmatprep.subr.mxu0 0.0
        %1835 = vmatpush1.msra.mxu0 %v1801
        %1836 = vmatprep.subr.mxu0 0.0
        %1837 = vmatpush1.msra.mxu0 %v1802
        %1838 = vmatprep.subr.mxu0 0.0
        %1839 = vmatpush1.msra.mxu0 %v1803
        %1840 = vmatprep.subr.mxu0 0.0
        %1841 = vmatpush1.msra.mxu0 %v1804
        %1842 = vmatprep.subr.mxu0 0.0
        %1843 = vmatpush1.msra.mxu0 %v1805
        %1844 = vmatprep.subr.mxu0 0.0
        %1845 = vmatpush1.msra.mxu0 %v1806
        %1846 = vmatprep.subr.mxu0 0.0
        %1847 = vmatpush1.msra.mxu0 0.0
        %1848 = vmatprep.subr.mxu0 0.0
        %1849 = vmatpush1.msra.mxu0 0.0
        %1850 = vmatprep.subr.mxu0 0.0
        %1851 = vmatpush1.msra.mxu0 0.0
        %1852 = vmatprep.subr.mxu0 0.0
        %1853 = vmatpush1.msra.mxu0 0.0
        %1854 = vmatprep.subr.mxu0 0.0
        %1855 = vmatpush1.msra.mxu0 0.0
        %1856 = vmatprep.subr.mxu0 0.0
        %1857 = vmatpush1.msra.mxu0 0.0
        %1858 = vmatprep.subr.mxu0 0.0
        %1859 = vmatpush1.msra.mxu0 0.0
        %1860 = vmatprep.subr.mxu0 0.0
        %1861 = vmatpush1.msra.mxu0 0.0
        %1862 = vmatprep.subr.mxu0 0.0
        %1863 = vmatpush1.msra.mxu0 0.0
        %1864 = vmatprep.subr.mxu0 0.0
        %1865 = vmatpush1.msra.mxu0 0.0
        %1866 = vmatprep.subr.mxu0 0.0
        %1867 = vmatpush1.msra.mxu0 0.0
        %1868 = vmatprep.subr.mxu0 0.0
        %1869 = vmatpush1.msra.mxu0 0.0
        %1870 = vmatprep.subr.mxu0 0.0
        %1871 = vmatpush1.msra.mxu0 0.0
        %1872 = vmatprep.subr.mxu0 0.0
        %1873 = vmatpush1.msra.mxu0 0.0
        %1874 = vmatprep.subr.mxu0 0.0
        %1875 = vmatpush1.msra.mxu0 0.0
        %1876 = vmatprep.subr.mxu0 0.0
        %1877 = vmatpush1.msra.mxu0 0.0
        %1878 = vmatprep.mubr.f32.mxu0 0.0
        %1879 = vmatmul.mubr.f32.gmra.mrb[0].mxu0 %v1788
        %v1880 = vpop.f32.mrb[0].mxu0
        %v1881 = vadd.f32 %v1812, %v1880
        %v1882 = vpop.f32.mrb[0].mxu0
        %1883 = vdwg.mxu0
        %1884 = vmax.xlane.f32.xlu0 %v1881
        %v1885 = vpop.xlane.xlu0 %1884
        %v1886 = vsub.f32 %v1881, %v1885
        %v1887 = vmul.f32 %v1886, 1.442695
        %v1888 = vpow.pop %v1887
        %1889 = vadd.xlane.f32.xlu0 %v1888
        %v1890 = vpop.xlane.xlu0 %1889
        %v1891 = vlog2.pop %v1890
        %v1892 = vmul.f32 %v1891, 0.6931472
        %v1893 = vadd.f32 %v1885, %v1892
        %v1894 = vsub.f32 %v1881, %v1893
        %1895 = vst [vmem:[%s532] sm:$0xff] %v1894
        %s1896 = sand.u32 %s281, 1
        %s1897 = scalar_lea.sflag [#allocation6], %s1896
        %s1898 = sand.u32 %s281, 1
        %s1899 = smul.addr %s1898, 8
        %s1900 = scalar_lea.vmem [#allocation21], %s1899
        // Predicated region
        $region105: #{more_atten_forward.3} parent=59 // pred_check
          %p1901 = pneg %p291
        $region106: #{more_atten_forward.3} parent=59 // pred_check_branch
          %1903 = sbr.rel (%p1901) target = $region108
        $region107: #{more_atten_forward.3} parent=59 // pred_region
          %s1905 = ssub.s32 128, 128
          %1906 = vsyncadd %s1897, %s1905
          %s1907 = sadd.s32 %s36, %s37
          %s1908 = smul.addr %s1907, 128
          %s1909 = scalar_lea.hbm %s10, %s1908
          %s1911 = sshll.u32 %s1900, 4
          %s1912 = int_to_ptr.vmem [resolvable:$true] %s1911
          %1914 = dma.vmem_to_hbm [thread:$0]  %s1912, 128, %s1909, %s1897
        $region108: #{more_atten_forward.3} parent=59 // pred_fallthru
          _
      $region60: #{more_atten_forward.3} parent=5 // pred_fallthru
        _
      %p1915 = scmp.le.s32.totalorder 2, %s27
      // Predicated region
      $region109: #{more_atten_forward.3} parent=5 // pred_check
        %p1916 = pneg %p1915
      $region110: #{more_atten_forward.3} parent=5 // pred_check_branch
        %1918 = sbr.rel (%p1916) target = $region112
      $region111: #{more_atten_forward.3} parent=5 // pred_region
        %s1919 = ssub.s32 %s27, 2
        // Predicated region
        $region113: #{more_atten_forward.3} parent=111 // pred_check
          %p1920 = pneg %p297
        $region114: #{more_atten_forward.3} parent=111 // pred_check_branch
          %1922 = sbr.rel (%p1920) target = $region116
        $region115: #{more_atten_forward.3} parent=111 // pred_region
          %s1923 = sand.u32 %s282, 1
          %s1924 = scalar_lea.sflag [#allocation6], %s1923
          %s1925 = sand.u32 %s282, 1
          %s1926 = smul.addr %s1925, 8
          %s1927 = scalar_lea.vmem [#allocation21], %s1926
          %1928 = dma.done %s1924, 128
        $region116: #{more_atten_forward.3} parent=111 // pred_fallthru
          _
      $region112: #{more_atten_forward.3} parent=5 // pred_fallthru
        _
    $region6: #{more_atten_forward.3} parent=1 // loop_footer
      %s31 = sadd.s32 1, %s27
    $region7: #{more_atten_forward.3} parent=1 // loop_footer_branch
      %26 = sbr.rel target = $region3
    $region8: #{more_atten_forward.3} parent=1 // loop_exit
      _
    %1929 = vsyncpa [#allocation5], 1
    %s1930 = scalar_lea.sflag [#allocation5], 1
    %1931 = vsyncpa %s1930, 1
    %1932 = vsyncpa [#allocation8], 1
    %1933 = vsyncpa [#allocation11], 1
    %1934 = vsyncpa [#allocation14], 1
    %1935 = vsyncpa [#allocation17], 1
    %1936 = vsyncpa [#allocation20], 1
    %1937 = vsyncpa [#allocation6], 1
    %s1938 = scalar_lea.sflag [#allocation6], 1
    %1939 = vsyncpa %s1938, 1

</llo_original>
